<compile_context>
chip_gen: v7x
topology: tpu7x:2x2x1
jax: 0.10.0
libtpu: 0.0.40
codegen_flags: <defaults>
</compile_context>

<pallas_src>
import functools

import jax
import jax.numpy as jnp
from jax import lax
from jax.experimental import pallas as pl
from jax.experimental.pallas import tpu as pltpu


def _round_up(x, m):
    return ((x + m - 1) // m) * m


def _vmem_capacity_bytes():
    try:
        return int(pltpu.get_tpu_info().vmem_capacity_bytes)
    except Exception:
        return 64 * 1024 * 1024          # conservative fallback (v7x per-TC VMEM)


def mlp_kernel(x_ref,
               w1_ref, b1_ref,
               w2_ref, b2_ref,
               w3_ref, b3_ref,
               w4_ref, b4_ref,
               w5_ref, b5_ref,
               o_ref,
               *, lane_dense_head):
    # Matmuls on the MXU in bf16 with f32 accumulation; bias-add / ReLU in f32.
    h = jnp.dot(x_ref[...].astype(jnp.bfloat16), w1_ref[...],
                preferred_element_type=jnp.float32) + b1_ref[...]
    h = jnp.maximum(h, 0.0)
    h = jnp.dot(h.astype(jnp.bfloat16), w2_ref[...],
                preferred_element_type=jnp.float32) + b2_ref[...]
    h = jnp.maximum(h, 0.0)
    h = jnp.dot(h.astype(jnp.bfloat16), w3_ref[...],
                preferred_element_type=jnp.float32) + b3_ref[...]
    h = jnp.maximum(h, 0.0)
    h = jnp.dot(h.astype(jnp.bfloat16), w4_ref[...],
                preferred_element_type=jnp.float32) + b4_ref[...]
    h = jnp.maximum(h, 0.0)

    if lane_dense_head:
        # n_out == 1: w5 is passed as an (8, H_pad) slab (row 0 = real weights, rows
        # 1..7 zero).  out8[p, j] = sum_k w5[p, k] * h[j, k] -> (8, TB); row 0 is the
        # prediction laid out with the batch along lanes, so the store is lane-dense.
        out8 = lax.dot_general(w5_ref[...], h.astype(jnp.bfloat16),
                               dimension_numbers=(((1,), (1,)), ((), ())),
                               preferred_element_type=jnp.float32)
        o_ref[...] = (out8[0:1, :] + b5_ref[...]).astype(o_ref.dtype)
    else:
        out = jnp.dot(h.astype(jnp.bfloat16), w5_ref[...],
                      preferred_element_type=jnp.float32) + b5_ref[...]
        o_ref[...] = out.astype(o_ref.dtype)


def neural_net_forward(x, params, *, tile_batch=2048):
    """Forward pass of NeuralNet.

    x      : (B, number_features) float32.
    params : list of 5 tuples (W_t, b); W_t is (in, out), b is (1, out) -- the
             transposed-torch layout for every layer, float32.
    """
    x = x.astype(jnp.float32)
    B, F = x.shape
    H = params[0][0].shape[1]
    n_out = params[-1][0].shape[1]
    lane_dense_head = (n_out == 1)

    # ---- pad hidden width to a multiple of 128 lanes (numerically exact) -------
    H_pad = _round_up(H, 128)

    def _pad2(a, r, c):
        return jnp.pad(a, ((0, r - a.shape[0]), (0, c - a.shape[1])))

    (w1, b1), (w2, b2), (w3, b3), (w4, b4), (w5, b5) = params
    w1p, b1p = _pad2(w1, F, H_pad), _pad2(b1, 1, H_pad)
    w2p, b2p = _pad2(w2, H_pad, H_pad), _pad2(b2, 1, H_pad)
    w3p, b3p = _pad2(w3, H_pad, H_pad), _pad2(b3, 1, H_pad)
    w4p, b4p = _pad2(w4, H_pad, H_pad), _pad2(b4, 1, H_pad)
    if lane_dense_head:
        # (H, 1) -> (8, H_pad) slab so the head matmul has a sublane-aligned M=8 LHS.
        w5p = jnp.zeros((8, H_pad), w5.dtype).at[0, :H].set(w5[:, 0])
        b5p = b5                                     # (1, 1)
    else:
        w5p = _pad2(w5, H_pad, n_out)
        b5p = b5                                     # (1, n_out)

    # bf16 weights (MXU-native); biases stay f32 (tiny, added to f32 accumulators).
    weights = [w.astype(jnp.bfloat16) for w in (w1p, w2p, w3p, w4p, w5p)]
    biases = [b.astype(jnp.float32) for b in (b1p, b2p, b3p, b4p, b5p)]
    weight_bytes = sum(a.size * a.dtype.itemsize for a in weights)
    weight_bytes += sum(a.size * a.dtype.itemsize for a in biases)

    # ---- tile size + VMEM limit derived from a real budget ---------------------
    cap = _vmem_capacity_bytes()                     # 128 MiB v5e/v6e, 64 MiB v7x
    budget = int(cap * 0.70)                         # headroom for compiler temps
    lane = lambda n: _round_up(max(int(n), 1), 128)  # VMEM lane granularity

    B8 = _round_up(B, 8)
    TB = max(8, min(_round_up(int(tile_batch), 8), B8))
    if B8 >= 16:
        # v7x megacore: make sure the "parallel" batch axis has >= 2 grid steps.
        TB = min(TB, _round_up(B8 // 2, 8))

    x_bufs = 3 if H_pad <= 256 else 2                # deeper x pipeline when mem-bound

    def _resident(tb):
        x_bytes = x_bufs * tb * lane(F) * 4
        h_bytes = 3 * tb * H_pad * 4                 # ~2 live f32 intermediates + bf16 temps
        if lane_dense_head:
            out_bytes = 2 * 8 * lane(tb) * 4
        else:
            out_bytes = 2 * tb * lane(n_out) * 4
        return x_bytes + h_bytes + out_bytes + weight_bytes

    while TB > 8 and _resident(TB) > budget:
        TB = max(8, _round_up(TB // 2, 8))

    padded_B = _round_up(B, TB)
    num_tiles = padded_B // TB
    if padded_B != B:
        x = jnp.pad(x, ((0, padded_B - B), (0, 0)))

    flat_inputs = [x]
    for w, b in zip(weights, biases):
        flat_inputs.append(w)
        flat_inputs.append(b)

    # ---- advisory cost estimate -------------------------------------------------
    flops = 2 * padded_B * (F * H_pad + 3 * H_pad * H_pad + H_pad * max(n_out, 8))
    bytes_accessed = padded_B * F * 4 + padded_B * max(n_out, 1) * 4 + weight_bytes
    cost = pl.CostEstimate(flops=flops, transcendentals=0, bytes_accessed=bytes_accessed)

    if lane_dense_head:
        out_shape = jax.ShapeDtypeStruct((num_tiles, TB), jnp.float32)
        out_spec = pl.BlockSpec((1, TB), lambda i: (i, 0))
    else:
        out_shape = jax.ShapeDtypeStruct((padded_B, n_out), jnp.float32)
        out_spec = pl.BlockSpec((TB, n_out), lambda i: (i, 0))

    def _run(use_pipeline_modes):
        if use_pipeline_modes and num_tiles >= 3 and x_bufs > 2:
            x_spec = pl.BlockSpec((TB, F), lambda i: (i, 0),
                                  pipeline_mode=pl.Buffered(x_bufs))
        else:
            x_spec = pl.BlockSpec((TB, F), lambda i: (i, 0))
        in_specs = [x_spec]
        for arr in flat_inputs[1:]:
            if use_pipeline_modes:
                # Constant-index block: fetched once, keep a single VMEM buffer.
                in_specs.append(pl.BlockSpec(arr.shape, lambda i: (0, 0),
                                             pipeline_mode=pl.Buffered(1)))
            else:
                in_specs.append(pl.BlockSpec(arr.shape, lambda i: (0, 0)))
        return pl.pallas_call(
            functools.partial(mlp_kernel, lane_dense_head=lane_dense_head),
            out_shape=out_shape,
            grid=(num_tiles,),
            in_specs=in_specs,
            out_specs=out_spec,
            compiler_params=pltpu.CompilerParams(
                dimension_semantics=("parallel",),       # megacore sharding on v7x
                vmem_limit_bytes=int(cap * 0.85),        # ~108 MiB v5e/v6e, ~54 MiB v7x
            ),
            cost_estimate=cost,
        )(*flat_inputs)

    try:
        out = _run(True)
    except Exception:
        # Safety net: if this JAX build rejects pl.Buffered on these specs, fall back
        # to default (double-buffered) pipelining — correctness is unaffected.
        out = _run(False)

    if lane_dense_head:
        return out.reshape(-1)[:B][:, None]
    return out[:B]


# ------------------------------ parameter helpers --------------------------------

def init_linear_params(key, fan_in, fan_out):
    """Mimic torch.nn.Linear default init: U(-1/sqrt(fan_in), 1/sqrt(fan_in))."""
    k_w, k_b = jax.random.split(key)
    bound = 1.0 / jnp.sqrt(jnp.float32(fan_in))
    # Torch stores W as (out, in); we keep the transposed (in, out) layout.
    w_t = jax.random.uniform(k_w, (fan_in, fan_out), jnp.float32, -bound, bound)
    b = jax.random.uniform(k_b, (1, fan_out), jnp.float32, -bound, bound)
    return w_t, b


def make_params(key, number_features, dimensions_hidden, number_output=1):
    keys = jax.random.split(key, 5)
    dims = [(number_features, dimensions_hidden),
            (dimensions_hidden, dimensions_hidden),
            (dimensions_hidden, dimensions_hidden),
            (dimensions_hidden, dimensions_hidden),
            (dimensions_hidden, number_output)]
    return [init_linear_params(k, fi, fo) for k, (fi, fo) in zip(keys, dims)]


def reference_forward_f32(x, params):
    h = x
    for i, (w, b) in enumerate(params):
        h = h @ w + b
        if i < len(params) - 1:
            h = jnp.maximum(h, 0.0)
    return h


def reference_forward_mixed(x, params):
    """Mirrors kernel precision: bf16 matmul operands, f32 accumulation, f32 bias/ReLU."""
    h = x.astype(jnp.float32)
    for i, (w, b) in enumerate(params):
        h = jnp.dot(h.astype(jnp.bfloat16), w.astype(jnp.bfloat16),
                    preferred_element_type=jnp.float32) + b
        if i < len(params) - 1:
            h = jnp.maximum(h, 0.0)
    return h


if __name__ == "__main__":
    key = jax.random.PRNGKey(0)
    k_x, k_p = jax.random.split(key)

    batch = 8
    number_features = 32
    dimensions_hidden = 32
    number_output = 1

    x = jax.random.normal(k_x, (batch, number_features), jnp.float32)
    params = make_params(k_p, number_features, dimensions_hidden, number_output)

    out = jax.block_until_ready(neural_net_forward(x, params))
    assert out.shape == (batch, number_output)

    ref_mixed = reference_forward_mixed(x, params)   # same precision recipe as the kernel
    ref_f32 = reference_forward_f32(x, params)       # pure-f32 semantic reference
    assert jnp.allclose(out, ref_mixed, atol=2e-3, rtol=2e-3), "mismatch vs mixed-precision reference"
    assert jnp.allclose(out, ref_f32, atol=1e-1, rtol=1e-1), "mismatch vs f32 reference"

    print("KERNEL_OK")
</pallas_src>

<mosaic_0001>
module attributes {stable_mosaic.version = 11 : i64} {
  func.func @mlp_kernel(%arg0: i32, %arg1: memref<8x32xf32, #tpu.memory_space<vmem>>, %arg2: memref<32x128xbf16, #tpu.memory_space<vmem>>, %arg3: memref<1x128xf32, #tpu.memory_space<vmem>>, %arg4: memref<128x128xbf16, #tpu.memory_space<vmem>>, %arg5: memref<1x128xf32, #tpu.memory_space<vmem>>, %arg6: memref<128x128xbf16, #tpu.memory_space<vmem>>, %arg7: memref<1x128xf32, #tpu.memory_space<vmem>>, %arg8: memref<128x128xbf16, #tpu.memory_space<vmem>>, %arg9: memref<1x128xf32, #tpu.memory_space<vmem>>, %arg10: memref<8x128xbf16, #tpu.memory_space<vmem>>, %arg11: memref<1x1xf32, #tpu.memory_space<vmem>>, %arg12: memref<1x8xf32, #tpu.memory_space<vmem>>) attributes {dimension_semantics = [#tpu.dimension_semantics<parallel>], iteration_bounds = array<i64: 1>, scalar_prefetch = 0 : i64, scratch_operands = 0 : i64, tpu.core_type = #tpu.core_type<tc>, window_params = [{transform_indices = @transform_0, window_bounds = array<i64: 8, 32>}, {pipeline_mode = #tpu.pipeline_mode<synchronous>, transform_indices = @transform_1, window_bounds = array<i64: 32, 128>}, {pipeline_mode = #tpu.pipeline_mode<synchronous>, transform_indices = @transform_2, window_bounds = array<i64: 1, 128>}, {pipeline_mode = #tpu.pipeline_mode<synchronous>, transform_indices = @transform_3, window_bounds = array<i64: 128, 128>}, {pipeline_mode = #tpu.pipeline_mode<synchronous>, transform_indices = @transform_4, window_bounds = array<i64: 1, 128>}, {pipeline_mode = #tpu.pipeline_mode<synchronous>, transform_indices = @transform_5, window_bounds = array<i64: 128, 128>}, {pipeline_mode = #tpu.pipeline_mode<synchronous>, transform_indices = @transform_6, window_bounds = array<i64: 1, 128>}, {pipeline_mode = #tpu.pipeline_mode<synchronous>, transform_indices = @transform_7, window_bounds = array<i64: 128, 128>}, {pipeline_mode = #tpu.pipeline_mode<synchronous>, transform_indices = @transform_8, window_bounds = array<i64: 1, 128>}, {pipeline_mode = #tpu.pipeline_mode<synchronous>, transform_indices = @transform_9, window_bounds = array<i64: 8, 128>}, {pipeline_mode = #tpu.pipeline_mode<synchronous>, transform_indices = @transform_10, window_bounds = array<i64: 1, 1>}, {transform_indices = @transform_11, window_bounds = array<i64: 1, 8>}]} {
    %c0 = arith.constant 0 : index
    %c0_0 = arith.constant 0 : index
    %0 = vector.load %arg1[%c0, %c0_0] : memref<8x32xf32, #tpu.memory_space<vmem>>, vector<8x32xf32>
    %1 = arith.truncf %0 : vector<8x32xf32> to vector<8x32xbf16>
    %c0_1 = arith.constant 0 : index
    %c0_2 = arith.constant 0 : index
    %2 = vector.load %arg2[%c0_1, %c0_2] : memref<32x128xbf16, #tpu.memory_space<vmem>>, vector<32x128xbf16>
    %cst = arith.constant dense<0.000000e+00> : vector<8x128xf32>
    %3 = tpu.matmul %1, %2, %cst {dimension_numbers = #tpu.dot_dimension_numbers<[1], [0], [0], [1], [0, 0, 1, 1], [], []>} : vector<8x32xbf16>, vector<32x128xbf16>, vector<8x128xf32> -> vector<8x128xf32>
    %c0_3 = arith.constant 0 : index
    %c0_4 = arith.constant 0 : index
    %4 = vector.load %arg3[%c0_3, %c0_4] : memref<1x128xf32, #tpu.memory_space<vmem>>, vector<1x128xf32>
    %5 = vector.broadcast %4 : vector<1x128xf32> to vector<8x128xf32>
    %6 = arith.addf %3, %5 : vector<8x128xf32>
    %cst_5 = arith.constant 0.000000e+00 : f32
    %7 = vector.broadcast %cst_5 : f32 to vector<8x128xf32>
    %8 = arith.maximumf %6, %7 : vector<8x128xf32>
    %9 = arith.truncf %8 : vector<8x128xf32> to vector<8x128xbf16>
    %c0_6 = arith.constant 0 : index
    %c0_7 = arith.constant 0 : index
    %10 = vector.load %arg4[%c0_6, %c0_7] : memref<128x128xbf16, #tpu.memory_space<vmem>>, vector<128x128xbf16>
    %cst_8 = arith.constant dense<0.000000e+00> : vector<8x128xf32>
    %11 = tpu.matmul %9, %10, %cst_8 {dimension_numbers = #tpu.dot_dimension_numbers<[1], [0], [0], [1], [0, 0, 1, 1], [], []>} : vector<8x128xbf16>, vector<128x128xbf16>, vector<8x128xf32> -> vector<8x128xf32>
    %c0_9 = arith.constant 0 : index
    %c0_10 = arith.constant 0 : index
    %12 = vector.load %arg5[%c0_9, %c0_10] : memref<1x128xf32, #tpu.memory_space<vmem>>, vector<1x128xf32>
    %13 = vector.broadcast %12 : vector<1x128xf32> to vector<8x128xf32>
    %14 = arith.addf %11, %13 : vector<8x128xf32>
    %cst_11 = arith.constant 0.000000e+00 : f32
    %15 = vector.broadcast %cst_11 : f32 to vector<8x128xf32>
    %16 = arith.maximumf %14, %15 : vector<8x128xf32>
    %17 = arith.truncf %16 : vector<8x128xf32> to vector<8x128xbf16>
    %c0_12 = arith.constant 0 : index
    %c0_13 = arith.constant 0 : index
    %18 = vector.load %arg6[%c0_12, %c0_13] : memref<128x128xbf16, #tpu.memory_space<vmem>>, vector<128x128xbf16>
    %cst_14 = arith.constant dense<0.000000e+00> : vector<8x128xf32>
    %19 = tpu.matmul %17, %18, %cst_14 {dimension_numbers = #tpu.dot_dimension_numbers<[1], [0], [0], [1], [0, 0, 1, 1], [], []>} : vector<8x128xbf16>, vector<128x128xbf16>, vector<8x128xf32> -> vector<8x128xf32>
    %c0_15 = arith.constant 0 : index
    %c0_16 = arith.constant 0 : index
    %20 = vector.load %arg7[%c0_15, %c0_16] : memref<1x128xf32, #tpu.memory_space<vmem>>, vector<1x128xf32>
    %21 = vector.broadcast %20 : vector<1x128xf32> to vector<8x128xf32>
    %22 = arith.addf %19, %21 : vector<8x128xf32>
    %cst_17 = arith.constant 0.000000e+00 : f32
    %23 = vector.broadcast %cst_17 : f32 to vector<8x128xf32>
    %24 = arith.maximumf %22, %23 : vector<8x128xf32>
    %25 = arith.truncf %24 : vector<8x128xf32> to vector<8x128xbf16>
    %c0_18 = arith.constant 0 : index
    %c0_19 = arith.constant 0 : index
    %26 = vector.load %arg8[%c0_18, %c0_19] : memref<128x128xbf16, #tpu.memory_space<vmem>>, vector<128x128xbf16>
    %cst_20 = arith.constant dense<0.000000e+00> : vector<8x128xf32>
    %27 = tpu.matmul %25, %26, %cst_20 {dimension_numbers = #tpu.dot_dimension_numbers<[1], [0], [0], [1], [0, 0, 1, 1], [], []>} : vector<8x128xbf16>, vector<128x128xbf16>, vector<8x128xf32> -> vector<8x128xf32>
    %c0_21 = arith.constant 0 : index
    %c0_22 = arith.constant 0 : index
    %28 = vector.load %arg9[%c0_21, %c0_22] : memref<1x128xf32, #tpu.memory_space<vmem>>, vector<1x128xf32>
    %29 = vector.broadcast %28 : vector<1x128xf32> to vector<8x128xf32>
    %30 = arith.addf %27, %29 : vector<8x128xf32>
    %cst_23 = arith.constant 0.000000e+00 : f32
    %31 = vector.broadcast %cst_23 : f32 to vector<8x128xf32>
    %32 = arith.maximumf %30, %31 : vector<8x128xf32>
    %c0_24 = arith.constant 0 : index
    %c0_25 = arith.constant 0 : index
    %33 = vector.load %arg10[%c0_24, %c0_25] : memref<8x128xbf16, #tpu.memory_space<vmem>>, vector<8x128xbf16>
    %34 = arith.truncf %32 : vector<8x128xf32> to vector<8x128xbf16>
    %cst_26 = arith.constant dense<0.000000e+00> : vector<8x8xf32>
    %35 = tpu.matmul %33, %34, %cst_26 {dimension_numbers = #tpu.dot_dimension_numbers<[1], [1], [0], [0], [0, 0, 1, 0], [], []>} : vector<8x128xbf16>, vector<8x128xbf16>, vector<8x8xf32> -> vector<8x8xf32>
    %36 = vector.extract_strided_slice %35 {offsets = [0, 0], sizes = [1, 8], strides = [1, 1]} : vector<8x8xf32> to vector<1x8xf32>
    %c0_27 = arith.constant 0 : index
    %c0_28 = arith.constant 0 : index
    %37 = vector.load %arg11[%c0_27, %c0_28] : memref<1x1xf32, #tpu.memory_space<vmem>>, vector<1x1xf32>
    %38 = vector.broadcast %37 : vector<1x1xf32> to vector<1x8xf32>
    %39 = arith.addf %36, %38 : vector<1x8xf32>
    %c0_29 = arith.constant 0 : index
    %c0_30 = arith.constant 0 : index
    %40 = vector.load %arg12[%c0_29, %c0_30] : memref<1x8xf32, #tpu.memory_space<vmem>>, vector<1x8xf32>
    tpu.vector_store %arg12[%c0_29, %c0_30], %39 {strides = array<i32>} : memref<1x8xf32, #tpu.memory_space<vmem>>, vector<1x8xf32>,
    return
  }
  func.func @transform_0(%arg0: i32) -> (i32, i32) {
    %c0_i32 = arith.constant 0 : i32
    %c0_i32_0 = arith.constant 0 : i32
    return %arg0, %c0_i32 : i32, i32
  }
  func.func @transform_1(%arg0: i32) -> (i32, i32) {
    %c0_i32 = arith.constant 0 : i32
    %c0_i32_0 = arith.constant 0 : i32
    %c0_i32_1 = arith.constant 0 : i32
    return %c0_i32, %c0_i32_0 : i32, i32
  }
  func.func @transform_2(%arg0: i32) -> (i32, i32) {
    %c0_i32 = arith.constant 0 : i32
    %c0_i32_0 = arith.constant 0 : i32
    %c0_i32_1 = arith.constant 0 : i32
    return %c0_i32, %c0_i32_0 : i32, i32
  }
  func.func @transform_3(%arg0: i32) -> (i32, i32) {
    %c0_i32 = arith.constant 0 : i32
    %c0_i32_0 = arith.constant 0 : i32
    %c0_i32_1 = arith.constant 0 : i32
    return %c0_i32, %c0_i32_0 : i32, i32
  }
  func.func @transform_4(%arg0: i32) -> (i32, i32) {
    %c0_i32 = arith.constant 0 : i32
    %c0_i32_0 = arith.constant 0 : i32
    %c0_i32_1 = arith.constant 0 : i32
    return %c0_i32, %c0_i32_0 : i32, i32
  }
  func.func @transform_5(%arg0: i32) -> (i32, i32) {
    %c0_i32 = arith.constant 0 : i32
    %c0_i32_0 = arith.constant 0 : i32
    %c0_i32_1 = arith.constant 0 : i32
    return %c0_i32, %c0_i32_0 : i32, i32
  }
  func.func @transform_6(%arg0: i32) -> (i32, i32) {
    %c0_i32 = arith.constant 0 : i32
    %c0_i32_0 = arith.constant 0 : i32
    %c0_i32_1 = arith.constant 0 : i32
    return %c0_i32, %c0_i32_0 : i32, i32
  }
  func.func @transform_7(%arg0: i32) -> (i32, i32) {
    %c0_i32 = arith.constant 0 : i32
    %c0_i32_0 = arith.constant 0 : i32
    %c0_i32_1 = arith.constant 0 : i32
    return %c0_i32, %c0_i32_0 : i32, i32
  }
  func.func @transform_8(%arg0: i32) -> (i32, i32) {
    %c0_i32 = arith.constant 0 : i32
    %c0_i32_0 = arith.constant 0 : i32
    %c0_i32_1 = arith.constant 0 : i32
    return %c0_i32, %c0_i32_0 : i32, i32
  }
  func.func @transform_9(%arg0: i32) -> (i32, i32) {
    %c0_i32 = arith.constant 0 : i32
    %c0_i32_0 = arith.constant 0 : i32
    %c0_i32_1 = arith.constant 0 : i32
    return %c0_i32, %c0_i32_0 : i32, i32
  }
  func.func @transform_10(%arg0: i32) -> (i32, i32) {
    %c0_i32 = arith.constant 0 : i32
    %c0_i32_0 = arith.constant 0 : i32
    %c0_i32_1 = arith.constant 0 : i32
    return %c0_i32, %c0_i32_0 : i32, i32
  }
  func.func @transform_11(%arg0: i32) -> (i32, i32) {
    %c0_i32 = arith.constant 0 : i32
    %c0_i32_0 = arith.constant 0 : i32
    return %arg0, %c0_i32 : i32, i32
  }
}

module attributes {stable_mosaic.version = 11 : i64} {
  func.func @mlp_kernel(%arg0: i32, %arg1: memref<8x32xf32, #tpu.memory_space<vmem>>, %arg2: memref<32x128xbf16, #tpu.memory_space<vmem>>, %arg3: memref<1x128xf32, #tpu.memory_space<vmem>>, %arg4: memref<128x128xbf16, #tpu.memory_space<vmem>>, %arg5: memref<1x128xf32, #tpu.memory_space<vmem>>, %arg6: memref<128x128xbf16, #tpu.memory_space<vmem>>, %arg7: memref<1x128xf32, #tpu.memory_space<vmem>>, %arg8: memref<128x128xbf16, #tpu.memory_space<vmem>>, %arg9: memref<1x128xf32, #tpu.memory_space<vmem>>, %arg10: memref<8x128xbf16, #tpu.memory_space<vmem>>, %arg11: memref<1x1xf32, #tpu.memory_space<vmem>>, %arg12: memref<1x8xf32, #tpu.memory_space<vmem>>) attributes {dimension_semantics = [#tpu.dimension_semantics<parallel>], iteration_bounds = array<i64: 1>, scalar_prefetch = 0 : i64, scratch_operands = 0 : i64, tpu.core_type = #tpu.core_type<tc>, window_params = [{transform_indices = @transform_0, window_bounds = array<i64: 8, 32>}, {pipeline_mode = #tpu.pipeline_mode<synchronous>, transform_indices = @transform_1, window_bounds = array<i64: 32, 128>}, {pipeline_mode = #tpu.pipeline_mode<synchronous>, transform_indices = @transform_2, window_bounds = array<i64: 1, 128>}, {pipeline_mode = #tpu.pipeline_mode<synchronous>, transform_indices = @transform_3, window_bounds = array<i64: 128, 128>}, {pipeline_mode = #tpu.pipeline_mode<synchronous>, transform_indices = @transform_4, window_bounds = array<i64: 1, 128>}, {pipeline_mode = #tpu.pipeline_mode<synchronous>, transform_indices = @transform_5, window_bounds = array<i64: 128, 128>}, {pipeline_mode = #tpu.pipeline_mode<synchronous>, transform_indices = @transform_6, window_bounds = array<i64: 1, 128>}, {pipeline_mode = #tpu.pipeline_mode<synchronous>, transform_indices = @transform_7, window_bounds = array<i64: 128, 128>}, {pipeline_mode = #tpu.pipeline_mode<synchronous>, transform_indices = @transform_8, window_bounds = array<i64: 1, 128>}, {pipeline_mode = #tpu.pipeline_mode<synchronous>, transform_indices = @transform_9, window_bounds = array<i64: 8, 128>}, {pipeline_mode = #tpu.pipeline_mode<synchronous>, transform_indices = @transform_10, window_bounds = array<i64: 1, 1>}, {transform_indices = @transform_11, window_bounds = array<i64: 1, 8>}]} {
    %c0 = arith.constant 0 : index
    %c0_0 = arith.constant 0 : index
    %0 = vector.load %arg1[%c0, %c0_0] : memref<8x32xf32, #tpu.memory_space<vmem>>, vector<8x32xf32>
    %1 = arith.truncf %0 : vector<8x32xf32> to vector<8x32xbf16>
    %c0_1 = arith.constant 0 : index
    %c0_2 = arith.constant 0 : index
    %2 = vector.load %arg2[%c0_1, %c0_2] : memref<32x128xbf16, #tpu.memory_space<vmem>>, vector<32x128xbf16>
    %cst = arith.constant dense<0.000000e+00> : vector<8x128xf32>
    %3 = tpu.matmul %1, %2, %cst {dimension_numbers = #tpu.dot_dimension_numbers<[1], [0], [0], [1], [0, 0, 1, 1], [], []>} : vector<8x32xbf16>, vector<32x128xbf16>, vector<8x128xf32> -> vector<8x128xf32>
    %c0_3 = arith.constant 0 : index
    %c0_4 = arith.constant 0 : index
    %4 = vector.load %arg3[%c0_3, %c0_4] : memref<1x128xf32, #tpu.memory_space<vmem>>, vector<1x128xf32>
    %5 = vector.broadcast %4 : vector<1x128xf32> to vector<8x128xf32>
    %6 = arith.addf %3, %5 : vector<8x128xf32>
    %cst_5 = arith.constant 0.000000e+00 : f32
    %7 = vector.broadcast %cst_5 : f32 to vector<8x128xf32>
    %8 = arith.maximumf %6, %7 : vector<8x128xf32>
    %9 = arith.truncf %8 : vector<8x128xf32> to vector<8x128xbf16>
    %c0_6 = arith.constant 0 : index
    %c0_7 = arith.constant 0 : index
    %10 = vector.load %arg4[%c0_6, %c0_7] : memref<128x128xbf16, #tpu.memory_space<vmem>>, vector<128x128xbf16>
    %cst_8 = arith.constant dense<0.000000e+00> : vector<8x128xf32>
    %11 = tpu.matmul %9, %10, %cst_8 {dimension_numbers = #tpu.dot_dimension_numbers<[1], [0], [0], [1], [0, 0, 1, 1], [], []>} : vector<8x128xbf16>, vector<128x128xbf16>, vector<8x128xf32> -> vector<8x128xf32>
    %c0_9 = arith.constant 0 : index
    %c0_10 = arith.constant 0 : index
    %12 = vector.load %arg5[%c0_9, %c0_10] : memref<1x128xf32, #tpu.memory_space<vmem>>, vector<1x128xf32>
    %13 = vector.broadcast %12 : vector<1x128xf32> to vector<8x128xf32>
    %14 = arith.addf %11, %13 : vector<8x128xf32>
    %cst_11 = arith.constant 0.000000e+00 : f32
    %15 = vector.broadcast %cst_11 : f32 to vector<8x128xf32>
    %16 = arith.maximumf %14, %15 : vector<8x128xf32>
    %17 = arith.truncf %16 : vector<8x128xf32> to vector<8x128xbf16>
    %c0_12 = arith.constant 0 : index
    %c0_13 = arith.constant 0 : index
    %18 = vector.load %arg6[%c0_12, %c0_13] : memref<128x128xbf16, #tpu.memory_space<vmem>>, vector<128x128xbf16>
    %cst_14 = arith.constant dense<0.000000e+00> : vector<8x128xf32>
    %19 = tpu.matmul %17, %18, %cst_14 {dimension_numbers = #tpu.dot_dimension_numbers<[1], [0], [0], [1], [0, 0, 1, 1], [], []>} : vector<8x128xbf16>, vector<128x128xbf16>, vector<8x128xf32> -> vector<8x128xf32>
    %c0_15 = arith.constant 0 : index
    %c0_16 = arith.constant 0 : index
    %20 = vector.load %arg7[%c0_15, %c0_16] : memref<1x128xf32, #tpu.memory_space<vmem>>, vector<1x128xf32>
    %21 = vector.broadcast %20 : vector<1x128xf32> to vector<8x128xf32>
    %22 = arith.addf %19, %21 : vector<8x128xf32>
    %cst_17 = arith.constant 0.000000e+00 : f32
    %23 = vector.broadcast %cst_17 : f32 to vector<8x128xf32>
    %24 = arith.maximumf %22, %23 : vector<8x128xf32>
    %25 = arith.truncf %24 : vector<8x128xf32> to vector<8x128xbf16>
    %c0_18 = arith.constant 0 : index
    %c0_19 = arith.constant 0 : index
    %26 = vector.load %arg8[%c0_18, %c0_19] : memref<128x128xbf16, #tpu.memory_space<vmem>>, vector<128x128xbf16>
    %cst_20 = arith.constant dense<0.000000e+00> : vector<8x128xf32>
    %27 = tpu.matmul %25, %26, %cst_20 {dimension_numbers = #tpu.dot_dimension_numbers<[1], [0], [0], [1], [0, 0, 1, 1], [], []>} : vector<8x128xbf16>, vector<128x128xbf16>, vector<8x128xf32> -> vector<8x128xf32>
    %c0_21 = arith.constant 0 : index
    %c0_22 = arith.constant 0 : index
    %28 = vector.load %arg9[%c0_21, %c0_22] : memref<1x128xf32, #tpu.memory_space<vmem>>, vector<1x128xf32>
    %29 = vector.broadcast %28 : vector<1x128xf32> to vector<8x128xf32>
    %30 = arith.addf %27, %29 : vector<8x128xf32>
    %cst_23 = arith.constant 0.000000e+00 : f32
    %31 = vector.broadcast %cst_23 : f32 to vector<8x128xf32>
    %32 = arith.maximumf %30, %31 : vector<8x128xf32>
    %c0_24 = arith.constant 0 : index
    %c0_25 = arith.constant 0 : index
    %33 = vector.load %arg10[%c0_24, %c0_25] : memref<8x128xbf16, #tpu.memory_space<vmem>>, vector<8x128xbf16>
    %34 = arith.truncf %32 : vector<8x128xf32> to vector<8x128xbf16>
    %cst_26 = arith.constant dense<0.000000e+00> : vector<8x8xf32>
    %35 = tpu.matmul %33, %34, %cst_26 {dimension_numbers = #tpu.dot_dimension_numbers<[1], [1], [0], [0], [0, 0, 1, 0], [], []>} : vector<8x128xbf16>, vector<8x128xbf16>, vector<8x8xf32> -> vector<8x8xf32>
    %36 = vector.extract_strided_slice %35 {offsets = [0, 0], sizes = [1, 8], strides = [1, 1]} : vector<8x8xf32> to vector<1x8xf32>
    %c0_27 = arith.constant 0 : index
    %c0_28 = arith.constant 0 : index
    %37 = vector.load %arg11[%c0_27, %c0_28] : memref<1x1xf32, #tpu.memory_space<vmem>>, vector<1x1xf32>
    %38 = vector.broadcast %37 : vector<1x1xf32> to vector<1x8xf32>
    %39 = arith.addf %36, %38 : vector<1x8xf32>
    %c0_29 = arith.constant 0 : index
    %c0_30 = arith.constant 0 : index
    %40 = vector.load %arg12[%c0_29, %c0_30] : memref<1x8xf32, #tpu.memory_space<vmem>>, vector<1x8xf32>
    tpu.vector_store %arg12[%c0_29, %c0_30], %39 {strides = array<i32>} : memref<1x8xf32, #tpu.memory_space<vmem>>, vector<1x8xf32>,
    return
  }
  func.func @transform_0(%arg0: i32) -> (i32, i32) {
    %c0_i32 = arith.constant 0 : i32
    %c0_i32_0 = arith.constant 0 : i32
    return %arg0, %c0_i32 : i32, i32
  }
  func.func @transform_1(%arg0: i32) -> (i32, i32) {
    %c0_i32 = arith.constant 0 : i32
    %c0_i32_0 = arith.constant 0 : i32
    %c0_i32_1 = arith.constant 0 : i32
    return %c0_i32, %c0_i32_0 : i32, i32
  }
  func.func @transform_2(%arg0: i32) -> (i32, i32) {
    %c0_i32 = arith.constant 0 : i32
    %c0_i32_0 = arith.constant 0 : i32
    %c0_i32_1 = arith.constant 0 : i32
    return %c0_i32, %c0_i32_0 : i32, i32
  }
  func.func @transform_3(%arg0: i32) -> (i32, i32) {
    %c0_i32 = arith.constant 0 : i32
    %c0_i32_0 = arith.constant 0 : i32
    %c0_i32_1 = arith.constant 0 : i32
    return %c0_i32, %c0_i32_0 : i32, i32
  }
  func.func @transform_4(%arg0: i32) -> (i32, i32) {
    %c0_i32 = arith.constant 0 : i32
    %c0_i32_0 = arith.constant 0 : i32
    %c0_i32_1 = arith.constant 0 : i32
    return %c0_i32, %c0_i32_0 : i32, i32
  }
  func.func @transform_5(%arg0: i32) -> (i32, i32) {
    %c0_i32 = arith.constant 0 : i32
    %c0_i32_0 = arith.constant 0 : i32
    %c0_i32_1 = arith.constant 0 : i32
    return %c0_i32, %c0_i32_0 : i32, i32
  }
  func.func @transform_6(%arg0: i32) -> (i32, i32) {
    %c0_i32 = arith.constant 0 : i32
    %c0_i32_0 = arith.constant 0 : i32
    %c0_i32_1 = arith.constant 0 : i32
    return %c0_i32, %c0_i32_0 : i32, i32
  }
  func.func @transform_7(%arg0: i32) -> (i32, i32) {
    %c0_i32 = arith.constant 0 : i32
    %c0_i32_0 = arith.constant 0 : i32
    %c0_i32_1 = arith.constant 0 : i32
    return %c0_i32, %c0_i32_0 : i32, i32
  }
  func.func @transform_8(%arg0: i32) -> (i32, i32) {
    %c0_i32 = arith.constant 0 : i32
    %c0_i32_0 = arith.constant 0 : i32
    %c0_i32_1 = arith.constant 0 : i32
    return %c0_i32, %c0_i32_0 : i32, i32
  }
  func.func @transform_9(%arg0: i32) -> (i32, i32) {
    %c0_i32 = arith.constant 0 : i32
    %c0_i32_0 = arith.constant 0 : i32
    %c0_i32_1 = arith.constant 0 : i32
    return %c0_i32, %c0_i32_0 : i32, i32
  }
  func.func @transform_10(%arg0: i32) -> (i32, i32) {
    %c0_i32 = arith.constant 0 : i32
    %c0_i32_0 = arith.constant 0 : i32
    %c0_i32_1 = arith.constant 0 : i32
    return %c0_i32, %c0_i32_0 : i32, i32
  }
  func.func @transform_11(%arg0: i32) -> (i32, i32) {
    %c0_i32 = arith.constant 0 : i32
    %c0_i32_0 = arith.constant 0 : i32
    return %arg0, %c0_i32 : i32, i32
  }
}

</mosaic_0001>

<llo_original>
// kernel: tpu_custom_call.1
$region0: #{tpu_custom_call.1}
  #allocation0 [shape = 'u32[]', space=smem, size = 0x4, offset = 0x4, fixed_abs, tag = 'smem constant byte address 0x4 - core index']
  #allocation1 [shape = 'u32[144,128]{1,0:T(1,128)}', space=vmem, size = 0x12000, scoped, tag = 'internal scratch']
  #allocation2 [shape = 'f32[1,1]{1,0:T(1,128)S(1)}', space=vmem, size = 0x200, scoped, tag = 'scoped memory for tpu_custom_call.1']
  %s0 = inlined_call_operand.hbm [shape: f32[8,32], index: 0, kind: input, shape index: {}]
  %s1 = inlined_call_operand.hbm [shape: bf16[32,128], index: 1, kind: input, shape index: {}]
  %s2 = inlined_call_operand.vmem [shape: f32[1,128], index: 2, kind: input, shape index: {}]
  %s3 = inlined_call_operand.hbm [shape: bf16[128,128], index: 3, kind: input, shape index: {}]
  %s4 = inlined_call_operand.vmem [shape: f32[1,128], index: 4, kind: input, shape index: {}]
  %s5 = inlined_call_operand.hbm [shape: bf16[128,128], index: 5, kind: input, shape index: {}]
  %s6 = inlined_call_operand.vmem [shape: f32[1,128], index: 6, kind: input, shape index: {}]
  %s7 = inlined_call_operand.hbm [shape: bf16[128,128], index: 7, kind: input, shape index: {}]
  %s8 = inlined_call_operand.vmem [shape: f32[1,128], index: 8, kind: input, shape index: {}]
  %s9 = inlined_call_operand.vmem [shape: bf16[8,128], index: 9, kind: input, shape index: {}]
  %s10 = inlined_call_operand.<no memory space> [shape: f32[1,1], index: 10, kind: input, shape index: {}]
  %s11 = inlined_call_operand.hbm [shape: f32[1,8], index: 11, kind: output, shape index: {}]
  %s12 = sld [smem:[#allocation0]]
  $region74: #{tpu_custom_call.1} parent=0
    _
  %s14 = ssub.s32 1, %s12
  %s15 = scalar_select 0, %s14, %s12
  %v16 = vstv %s10
  %17 = vst [vmem:[#allocation2] sm:$0x1] %v16
  $region1: #{tpu_custom_call.1} parent=0
    #allocation3 [shape = 'u8[4096]{0}', space=vmem, size = 0x1000, scoped, tag = 'input window, operand 0, single buffered']
    #allocation4 [shape = 's32[1]{0}', space=sflag, size = 0x4, scoped, tag = 'scoped memory for tpu_custom_call.1']
    #allocation5 [shape = 's32[1]{0}', space=sflag, size = 0x4, scoped, tag = 'scoped memory for tpu_custom_call.1']
    #allocation6 [shape = 'u8[8192]{0}', space=vmem, size = 0x2000, scoped, tag = 'input window, operand 1, single buffered']
    #allocation7 [shape = 's32[1]{0}', space=sflag, size = 0x4, scoped, tag = 'scoped memory for tpu_custom_call.1']
    #allocation8 [shape = 'u8[32768]{0}', space=vmem, size = 0x8000, scoped, tag = 'input window, operand 3, single buffered']
    #allocation9 [shape = 'u8[32768]{0}', space=vmem, size = 0x8000, scoped, tag = 'input window, operand 5, single buffered']
    #allocation10 [shape = 's32[1]{0}', space=sflag, size = 0x4, scoped, tag = 'scoped memory for tpu_custom_call.1']
    #allocation11 [shape = 'u8[32768]{0}', space=vmem, size = 0x8000, scoped, tag = 'input window, operand 7, single buffered']
    #allocation12 [shape = 'u8[512]{0}', space=vmem, size = 0x400, scoped, tag = 'output window, operand 0, single buffered']
    %18 = vsyncpa [#allocation4], 0
    %19 = vsyncpa [#allocation7], 0
    %20 = vsyncpa [#allocation10], 0
    %21 = vsyncpa [#allocation5], 0
    // Predicated region
    $region2: #{tpu_custom_call.1} parent=1 // pred_check
      _
    $region3: #{tpu_custom_call.1} parent=1 // pred_check_branch
      %23 = sbr.rel (0) target = $region5
    $region4: #{tpu_custom_call.1} parent=1 // pred_region
      %s25 = ssub.s32 128, 128
      %26 = vsyncadd [#allocation4], %s25
      %s28 = sshll.u32 [#allocation3], 4
      %s29 = int_to_ptr.vmem [resolvable:$true] %s28
      %31 = dma.hbm_to_vmem [thread:$0]  %s0, 128, %s29, [#allocation4]
    $region5: #{tpu_custom_call.1} parent=1 // pred_fallthru
      _
    // Predicated region
    $region6: #{tpu_custom_call.1} parent=1 // pred_check
      _
    $region7: #{tpu_custom_call.1} parent=1 // pred_check_branch
      %33 = sbr.rel (0) target = $region9
    $region8: #{tpu_custom_call.1} parent=1 // pred_region
      %s35 = ssub.s32 256, 256
      %36 = vsyncadd [#allocation7], %s35
      %s37 = sshll.u32 [#allocation6], 4
      %s38 = int_to_ptr.vmem [resolvable:$true] %s37
      %43 = dma.hbm_to_vmem [thread:$0]  %s1, 256, %s38, [#allocation7], 64, 64, 4
    $region9: #{tpu_custom_call.1} parent=1 // pred_fallthru
      _
    // Predicated region
    $region10: #{tpu_custom_call.1} parent=1 // pred_check
      _
    $region11: #{tpu_custom_call.1} parent=1 // pred_check_branch
      %45 = sbr.rel (0) target = $region13
    $region12: #{tpu_custom_call.1} parent=1 // pred_region
      _
    $region13: #{tpu_custom_call.1} parent=1 // pred_fallthru
      _
    // Predicated region
    $region14: #{tpu_custom_call.1} parent=1 // pred_check
      _
    $region15: #{tpu_custom_call.1} parent=1 // pred_check_branch
      %47 = sbr.rel (0) target = $region17
    $region16: #{tpu_custom_call.1} parent=1 // pred_region
      %s49 = ssub.s32 1024, 1024
      %50 = vsyncadd [#allocation7], %s49
      %s51 = sshll.u32 [#allocation8], 4
      %s52 = int_to_ptr.vmem [resolvable:$true] %s51
      %57 = dma.hbm_to_vmem [thread:$0]  %s3, 1024, %s52, [#allocation7], 64, 64, 4
    $region17: #{tpu_custom_call.1} parent=1 // pred_fallthru
      _
    // Predicated region
    $region18: #{tpu_custom_call.1} parent=1 // pred_check
      _
    $region19: #{tpu_custom_call.1} parent=1 // pred_check_branch
      %59 = sbr.rel (0) target = $region21
    $region20: #{tpu_custom_call.1} parent=1 // pred_region
      _
    $region21: #{tpu_custom_call.1} parent=1 // pred_fallthru
      _
    // Predicated region
    $region22: #{tpu_custom_call.1} parent=1 // pred_check
      _
    $region23: #{tpu_custom_call.1} parent=1 // pred_check_branch
      %61 = sbr.rel (0) target = $region25
    $region24: #{tpu_custom_call.1} parent=1 // pred_region
      %s63 = ssub.s32 1024, 1024
      %64 = vsyncadd [#allocation10], %s63
      %s65 = sshll.u32 [#allocation9], 4
      %s66 = int_to_ptr.vmem [resolvable:$true] %s65
      %71 = dma.hbm_to_vmem [thread:$0]  %s5, 1024, %s66, [#allocation10], 64, 64, 4
    $region25: #{tpu_custom_call.1} parent=1 // pred_fallthru
      _
    // Predicated region
    $region26: #{tpu_custom_call.1} parent=1 // pred_check
      _
    $region27: #{tpu_custom_call.1} parent=1 // pred_check_branch
      %73 = sbr.rel (0) target = $region29
    $region28: #{tpu_custom_call.1} parent=1 // pred_region
      _
    $region29: #{tpu_custom_call.1} parent=1 // pred_fallthru
      _
    // Predicated region
    $region30: #{tpu_custom_call.1} parent=1 // pred_check
      _
    $region31: #{tpu_custom_call.1} parent=1 // pred_check_branch
      %75 = sbr.rel (0) target = $region33
    $region32: #{tpu_custom_call.1} parent=1 // pred_region
      %s77 = ssub.s32 1024, 1024
      %78 = vsyncadd [#allocation10], %s77
      %s79 = sshll.u32 [#allocation11], 4
      %s80 = int_to_ptr.vmem [resolvable:$true] %s79
      %85 = dma.hbm_to_vmem [thread:$0]  %s7, 1024, %s80, [#allocation10], 64, 64, 4
    $region33: #{tpu_custom_call.1} parent=1 // pred_fallthru
      _
    // Predicated region
    $region34: #{tpu_custom_call.1} parent=1 // pred_check
      _
    $region35: #{tpu_custom_call.1} parent=1 // pred_check_branch
      %87 = sbr.rel (0) target = $region37
    $region36: #{tpu_custom_call.1} parent=1 // pred_region
      _
    $region37: #{tpu_custom_call.1} parent=1 // pred_fallthru
      _
    // Predicated region
    $region38: #{tpu_custom_call.1} parent=1 // pred_check
      _
    $region39: #{tpu_custom_call.1} parent=1 // pred_check_branch
      %89 = sbr.rel (0) target = $region41
    $region40: #{tpu_custom_call.1} parent=1 // pred_region
      _
    $region41: #{tpu_custom_call.1} parent=1 // pred_fallthru
      _
    // Predicated region
    $region42: #{tpu_custom_call.1} parent=1 // pred_check
      _
    $region43: #{tpu_custom_call.1} parent=1 // pred_check_branch
      %91 = sbr.rel (0) target = $region45
    $region44: #{tpu_custom_call.1} parent=1 // pred_region
      _
    $region45: #{tpu_custom_call.1} parent=1 // pred_fallthru
      _
    // Predicated region
    $region46: #{tpu_custom_call.1} parent=1 // pred_check
      _
    $region47: #{tpu_custom_call.1} parent=1 // pred_check_branch
      %93 = sbr.rel (0) target = $region49
    $region48: #{tpu_custom_call.1} parent=1 // pred_region
      %94 = dma.done [#allocation4], 128
    $region49: #{tpu_custom_call.1} parent=1 // pred_fallthru
      _
    // Predicated region
    $region50: #{tpu_custom_call.1} parent=1 // pred_check
      _
    $region51: #{tpu_custom_call.1} parent=1 // pred_check_branch
      %96 = sbr.rel (0) target = $region53
    $region52: #{tpu_custom_call.1} parent=1 // pred_region
      %97 = dma.done [#allocation7], 256
    $region53: #{tpu_custom_call.1} parent=1 // pred_fallthru
      _
    // Predicated region
    $region54: #{tpu_custom_call.1} parent=1 // pred_check
      _
    $region55: #{tpu_custom_call.1} parent=1 // pred_check_branch
      %99 = sbr.rel (0) target = $region57
    $region56: #{tpu_custom_call.1} parent=1 // pred_region
      %100 = dma.done [#allocation7], 1024
    $region57: #{tpu_custom_call.1} parent=1 // pred_fallthru
      _
    // Predicated region
    $region58: #{tpu_custom_call.1} parent=1 // pred_check
      _
    $region59: #{tpu_custom_call.1} parent=1 // pred_check_branch
      %102 = sbr.rel (0) target = $region61
    $region60: #{tpu_custom_call.1} parent=1 // pred_region
      %103 = dma.done [#allocation10], 1024
    $region61: #{tpu_custom_call.1} parent=1 // pred_fallthru
      _
    // Predicated region
    $region62: #{tpu_custom_call.1} parent=1 // pred_check
      _
    $region63: #{tpu_custom_call.1} parent=1 // pred_check_branch
      %105 = sbr.rel (0) target = $region65
    $region64: #{tpu_custom_call.1} parent=1 // pred_region
      %106 = dma.done [#allocation10], 1024
    $region65: #{tpu_custom_call.1} parent=1 // pred_fallthru
      _
    %v108 = vld [vmem:[#allocation3] sm:$0xff]
    %v109 = vpack.c.bf16 %v108, %v108
    %v110 = vld [vmem:[#allocation6] sm:$0xf]
    %v111 = vld [vmem:[#allocation6 + $0x4] sm:$0xf]
    %v112 = vld [vmem:[#allocation6 + $0x8] sm:$0xf]
    %v113 = vld [vmem:[#allocation6 + $0xc] sm:$0xf]
    %v114 = vld [vmem:[%s2] sm:$0x1]
    %v116 = vlaneseq
    %v117 = vshrl.u32 %v116, 7
    %v118 = vsub.s32 0, %v117
    %v119 = vrot.slane %v114, %v118
    %v125 = vunpack.c.l.b16 %v110
    %v126 = vunpack.c.l.b16 %v111
    %v127 = vunpack.c.l.b16 %v112
    %v128 = vunpack.c.l.b16 %v113
    %v129 = vpack.c.b16 %v126, %v125
    %v130 = vpack.c.b16 %v128, %v127
    %vm133 = vcmask 261120
    %v135 = vsel %vm133, %v109, 0
    %137 = vmatprep.subr.bf16.mxu0 0
    %138 = vmatpush1.bf16.msra.mxu0 %v129
    %139 = vmatprep.subr.bf16.mxu0 0
    %140 = vmatpush1.bf16.msra.mxu0 %v130
    %141 = vmatprep.subr.bf16.mxu0 0
    %142 = vmatpush1.bf16.msra.mxu0 0
    %143 = vmatprep.subr.bf16.mxu0 0
    %144 = vmatpush1.bf16.msra.mxu0 0
    %145 = vmatprep.subr.bf16.mxu0 0
    %146 = vmatpush1.bf16.msra.mxu0 0
    %147 = vmatprep.subr.bf16.mxu0 0
    %148 = vmatpush1.bf16.msra.mxu0 0
    %149 = vmatprep.subr.bf16.mxu0 0
    %150 = vmatpush1.bf16.msra.mxu0 0
    %151 = vmatprep.subr.bf16.mxu0 0
    %152 = vmatpush1.bf16.msra.mxu0 0
    %153 = vmatprep.subr.bf16.mxu0 0
    %154 = vmatpush1.bf16.msra.mxu0 0
    %155 = vmatprep.subr.bf16.mxu0 0
    %156 = vmatpush1.bf16.msra.mxu0 0
    %157 = vmatprep.subr.bf16.mxu0 0
    %158 = vmatpush1.bf16.msra.mxu0 0
    %159 = vmatprep.subr.bf16.mxu0 0
    %160 = vmatpush1.bf16.msra.mxu0 0
    %161 = vmatprep.subr.bf16.mxu0 0
    %162 = vmatpush1.bf16.msra.mxu0 0
    %163 = vmatprep.subr.bf16.mxu0 0
    %164 = vmatpush1.bf16.msra.mxu0 0
    %165 = vmatprep.subr.bf16.mxu0 0
    %166 = vmatpush1.bf16.msra.mxu0 0
    %167 = vmatprep.subr.bf16.mxu0 0
    %168 = vmatpush1.bf16.msra.mxu0 0
    %169 = vmatprep.mubr.bf16.mxu0 0
    %170 = vmatmul.mubr.bf16.gmra.mrb[0].mxu0 %v135
    %v171 = vpop.f32.mrb[0].mxu0
    %v172 = vadd.f32 %v119, %v171
    %v173 = vpop.f32.mrb[0].mxu0
    %v174 = vpop.f32.mrb[0].mxu0
    %v175 = vpop.f32.mrb[0].mxu0
    %176 = vdwg.mxu0
    %v177 = vmax.f32 %v172, 0.0
    %v178 = vpack.c.bf16 %v177, %v177
    %v179 = vld [vmem:[#allocation8] sm:$0xf]
    %v180 = vld [vmem:[#allocation8 + $0x4] sm:$0xf]
    %v181 = vld [vmem:[#allocation8 + $0x8] sm:$0xf]
    %v182 = vld [vmem:[#allocation8 + $0xc] sm:$0xf]
    %v183 = vld [vmem:[#allocation8 + $0x10] sm:$0xf]
    %v184 = vld [vmem:[#allocation8 + $0x14] sm:$0xf]
    %v185 = vld [vmem:[#allocation8 + $0x18] sm:$0xf]
    %v186 = vld [vmem:[#allocation8 + $0x1c] sm:$0xf]
    %v187 = vld [vmem:[#allocation8 + $0x20] sm:$0xf]
    %v188 = vld [vmem:[#allocation8 + $0x24] sm:$0xf]
    %v189 = vld [vmem:[#allocation8 + $0x28] sm:$0xf]
    %v190 = vld [vmem:[#allocation8 + $0x2c] sm:$0xf]
    %v191 = vld [vmem:[#allocation8 + $0x30] sm:$0xf]
    %v192 = vld [vmem:[#allocation8 + $0x34] sm:$0xf]
    %v193 = vld [vmem:[#allocation8 + $0x38] sm:$0xf]
    %v194 = vld [vmem:[#allocation8 + $0x3c] sm:$0xf]
    %v195 = vld [vmem:[%s4] sm:$0x1]
    %v197 = vlaneseq
    %v198 = vshrl.u32 %v197, 7
    %v199 = vsub.s32 0, %v198
    %v200 = vrot.slane %v195, %v199
    %v218 = vunpack.c.l.b16 %v179
    %v219 = vunpack.c.l.b16 %v180
    %v220 = vunpack.c.l.b16 %v181
    %v221 = vunpack.c.l.b16 %v182
    %v222 = vunpack.c.l.b16 %v183
    %v223 = vunpack.c.l.b16 %v184
    %v224 = vunpack.c.l.b16 %v185
    %v225 = vunpack.c.l.b16 %v186
    %v226 = vunpack.c.l.b16 %v187
    %v227 = vunpack.c.l.b16 %v188
    %v228 = vunpack.c.l.b16 %v189
    %v229 = vunpack.c.l.b16 %v190
    %v230 = vunpack.c.l.b16 %v191
    %v231 = vunpack.c.l.b16 %v192
    %v232 = vunpack.c.l.b16 %v193
    %v233 = vunpack.c.l.b16 %v194
    %v234 = vpack.c.b16 %v219, %v218
    %v235 = vpack.c.b16 %v221, %v220
    %v236 = vpack.c.b16 %v223, %v222
    %v237 = vpack.c.b16 %v225, %v224
    %v238 = vpack.c.b16 %v227, %v226
    %v239 = vpack.c.b16 %v229, %v228
    %v240 = vpack.c.b16 %v231, %v230
    %v241 = vpack.c.b16 %v233, %v232
    %250 = vmatprep.subr.bf16.mxu0 0
    %251 = vmatpush1.bf16.msra.mxu0 %v234
    %252 = vmatprep.subr.bf16.mxu0 0
    %253 = vmatpush1.bf16.msra.mxu0 %v235
    %254 = vmatprep.subr.bf16.mxu0 0
    %255 = vmatpush1.bf16.msra.mxu0 %v236
    %256 = vmatprep.subr.bf16.mxu0 0
    %257 = vmatpush1.bf16.msra.mxu0 %v237
    %258 = vmatprep.subr.bf16.mxu0 0
    %259 = vmatpush1.bf16.msra.mxu0 %v238
    %260 = vmatprep.subr.bf16.mxu0 0
    %261 = vmatpush1.bf16.msra.mxu0 %v239
    %262 = vmatprep.subr.bf16.mxu0 0
    %263 = vmatpush1.bf16.msra.mxu0 %v240
    %264 = vmatprep.subr.bf16.mxu0 0
    %265 = vmatpush1.bf16.msra.mxu0 %v241
    %266 = vmatprep.subr.bf16.mxu0 0
    %267 = vmatpush1.bf16.msra.mxu0 0
    %268 = vmatprep.subr.bf16.mxu0 0
    %269 = vmatpush1.bf16.msra.mxu0 0
    %270 = vmatprep.subr.bf16.mxu0 0
    %271 = vmatpush1.bf16.msra.mxu0 0
    %272 = vmatprep.subr.bf16.mxu0 0
    %273 = vmatpush1.bf16.msra.mxu0 0
    %274 = vmatprep.subr.bf16.mxu0 0
    %275 = vmatpush1.bf16.msra.mxu0 0
    %276 = vmatprep.subr.bf16.mxu0 0
    %277 = vmatpush1.bf16.msra.mxu0 0
    %278 = vmatprep.subr.bf16.mxu0 0
    %279 = vmatpush1.bf16.msra.mxu0 0
    %280 = vmatprep.subr.bf16.mxu0 0
    %281 = vmatpush1.bf16.msra.mxu0 0
    %282 = vmatprep.mubr.bf16.mxu0 0
    %283 = vmatmul.mubr.bf16.gmra.mrb[0].mxu0 %v178
    %v284 = vpop.f32.mrb[0].mxu0
    %v285 = vadd.f32 %v200, %v284
    %v286 = vpop.f32.mrb[0].mxu0
    %v287 = vpop.f32.mrb[0].mxu0
    %v288 = vpop.f32.mrb[0].mxu0
    %289 = vdwg.mxu0
    %v290 = vmax.f32 %v285, 0.0
    %v291 = vpack.c.bf16 %v290, %v290
    %v292 = vld [vmem:[#allocation9] sm:$0xf]
    %v293 = vld [vmem:[#allocation9 + $0x4] sm:$0xf]
    %v294 = vld [vmem:[#allocation9 + $0x8] sm:$0xf]
    %v295 = vld [vmem:[#allocation9 + $0xc] sm:$0xf]
    %v296 = vld [vmem:[#allocation9 + $0x10] sm:$0xf]
    %v297 = vld [vmem:[#allocation9 + $0x14] sm:$0xf]
    %v298 = vld [vmem:[#allocation9 + $0x18] sm:$0xf]
    %v299 = vld [vmem:[#allocation9 + $0x1c] sm:$0xf]
    %v300 = vld [vmem:[#allocation9 + $0x20] sm:$0xf]
    %v301 = vld [vmem:[#allocation9 + $0x24] sm:$0xf]
    %v302 = vld [vmem:[#allocation9 + $0x28] sm:$0xf]
    %v303 = vld [vmem:[#allocation9 + $0x2c] sm:$0xf]
    %v304 = vld [vmem:[#allocation9 + $0x30] sm:$0xf]
    %v305 = vld [vmem:[#allocation9 + $0x34] sm:$0xf]
    %v306 = vld [vmem:[#allocation9 + $0x38] sm:$0xf]
    %v307 = vld [vmem:[#allocation9 + $0x3c] sm:$0xf]
    %v308 = vld [vmem:[%s6] sm:$0x1]
    %v310 = vlaneseq
    %v311 = vshrl.u32 %v310, 7
    %v312 = vsub.s32 0, %v311
    %v313 = vrot.slane %v308, %v312
    %v331 = vunpack.c.l.b16 %v292
    %v332 = vunpack.c.l.b16 %v293
    %v333 = vunpack.c.l.b16 %v294
    %v334 = vunpack.c.l.b16 %v295
    %v335 = vunpack.c.l.b16 %v296
    %v336 = vunpack.c.l.b16 %v297
    %v337 = vunpack.c.l.b16 %v298
    %v338 = vunpack.c.l.b16 %v299
    %v339 = vunpack.c.l.b16 %v300
    %v340 = vunpack.c.l.b16 %v301
    %v341 = vunpack.c.l.b16 %v302
    %v342 = vunpack.c.l.b16 %v303
    %v343 = vunpack.c.l.b16 %v304
    %v344 = vunpack.c.l.b16 %v305
    %v345 = vunpack.c.l.b16 %v306
    %v346 = vunpack.c.l.b16 %v307
    %v347 = vpack.c.b16 %v332, %v331
    %v348 = vpack.c.b16 %v334, %v333
    %v349 = vpack.c.b16 %v336, %v335
    %v350 = vpack.c.b16 %v338, %v337
    %v351 = vpack.c.b16 %v340, %v339
    %v352 = vpack.c.b16 %v342, %v341
    %v353 = vpack.c.b16 %v344, %v343
    %v354 = vpack.c.b16 %v346, %v345
    %363 = vmatprep.subr.bf16.mxu0 0
    %364 = vmatpush1.bf16.msra.mxu0 %v347
    %365 = vmatprep.subr.bf16.mxu0 0
    %366 = vmatpush1.bf16.msra.mxu0 %v348
    %367 = vmatprep.subr.bf16.mxu0 0
    %368 = vmatpush1.bf16.msra.mxu0 %v349
    %369 = vmatprep.subr.bf16.mxu0 0
    %370 = vmatpush1.bf16.msra.mxu0 %v350
    %371 = vmatprep.subr.bf16.mxu0 0
    %372 = vmatpush1.bf16.msra.mxu0 %v351
    %373 = vmatprep.subr.bf16.mxu0 0
    %374 = vmatpush1.bf16.msra.mxu0 %v352
    %375 = vmatprep.subr.bf16.mxu0 0
    %376 = vmatpush1.bf16.msra.mxu0 %v353
    %377 = vmatprep.subr.bf16.mxu0 0
    %378 = vmatpush1.bf16.msra.mxu0 %v354
    %379 = vmatprep.subr.bf16.mxu0 0
    %380 = vmatpush1.bf16.msra.mxu0 0
    %381 = vmatprep.subr.bf16.mxu0 0
    %382 = vmatpush1.bf16.msra.mxu0 0
    %383 = vmatprep.subr.bf16.mxu0 0
    %384 = vmatpush1.bf16.msra.mxu0 0
    %385 = vmatprep.subr.bf16.mxu0 0
    %386 = vmatpush1.bf16.msra.mxu0 0
    %387 = vmatprep.subr.bf16.mxu0 0
    %388 = vmatpush1.bf16.msra.mxu0 0
    %389 = vmatprep.subr.bf16.mxu0 0
    %390 = vmatpush1.bf16.msra.mxu0 0
    %391 = vmatprep.subr.bf16.mxu0 0
    %392 = vmatpush1.bf16.msra.mxu0 0
    %393 = vmatprep.subr.bf16.mxu0 0
    %394 = vmatpush1.bf16.msra.mxu0 0
    %395 = vmatprep.mubr.bf16.mxu0 0
    %396 = vmatmul.mubr.bf16.gmra.mrb[0].mxu0 %v291
    %v397 = vpop.f32.mrb[0].mxu0
    %v398 = vadd.f32 %v313, %v397
    %v399 = vpop.f32.mrb[0].mxu0
    %v400 = vpop.f32.mrb[0].mxu0
    %v401 = vpop.f32.mrb[0].mxu0
    %402 = vdwg.mxu0
    %v403 = vmax.f32 %v398, 0.0
    %v404 = vpack.c.bf16 %v403, %v403
    %v405 = vld [vmem:[#allocation11] sm:$0xf]
    %v406 = vld [vmem:[#allocation11 + $0x4] sm:$0xf]
    %v407 = vld [vmem:[#allocation11 + $0x8] sm:$0xf]
    %v408 = vld [vmem:[#allocation11 + $0xc] sm:$0xf]
    %v409 = vld [vmem:[#allocation11 + $0x10] sm:$0xf]
    %v410 = vld [vmem:[#allocation11 + $0x14] sm:$0xf]
    %v411 = vld [vmem:[#allocation11 + $0x18] sm:$0xf]
    %v412 = vld [vmem:[#allocation11 + $0x1c] sm:$0xf]
    %v413 = vld [vmem:[#allocation11 + $0x20] sm:$0xf]
    %v414 = vld [vmem:[#allocation11 + $0x24] sm:$0xf]
    %v415 = vld [vmem:[#allocation11 + $0x28] sm:$0xf]
    %v416 = vld [vmem:[#allocation11 + $0x2c] sm:$0xf]
    %v417 = vld [vmem:[#allocation11 + $0x30] sm:$0xf]
    %v418 = vld [vmem:[#allocation11 + $0x34] sm:$0xf]
    %v419 = vld [vmem:[#allocation11 + $0x38] sm:$0xf]
    %v420 = vld [vmem:[#allocation11 + $0x3c] sm:$0xf]
    %v421 = vld [vmem:[%s8] sm:$0x1]
    %v423 = vlaneseq
    %v424 = vshrl.u32 %v423, 7
    %v425 = vsub.s32 0, %v424
    %v426 = vrot.slane %v421, %v425
    %v444 = vunpack.c.l.b16 %v405
    %v445 = vunpack.c.l.b16 %v406
    %v446 = vunpack.c.l.b16 %v407
    %v447 = vunpack.c.l.b16 %v408
    %v448 = vunpack.c.l.b16 %v409
    %v449 = vunpack.c.l.b16 %v410
    %v450 = vunpack.c.l.b16 %v411
    %v451 = vunpack.c.l.b16 %v412
    %v452 = vunpack.c.l.b16 %v413
    %v453 = vunpack.c.l.b16 %v414
    %v454 = vunpack.c.l.b16 %v415
    %v455 = vunpack.c.l.b16 %v416
    %v456 = vunpack.c.l.b16 %v417
    %v457 = vunpack.c.l.b16 %v418
    %v458 = vunpack.c.l.b16 %v419
    %v459 = vunpack.c.l.b16 %v420
    %v460 = vpack.c.b16 %v445, %v444
    %v461 = vpack.c.b16 %v447, %v446
    %v462 = vpack.c.b16 %v449, %v448
    %v463 = vpack.c.b16 %v451, %v450
    %v464 = vpack.c.b16 %v453, %v452
    %v465 = vpack.c.b16 %v455, %v454
    %v466 = vpack.c.b16 %v457, %v456
    %v467 = vpack.c.b16 %v459, %v458
    %476 = vmatprep.subr.bf16.mxu0 0
    %477 = vmatpush1.bf16.msra.mxu0 %v460
    %478 = vmatprep.subr.bf16.mxu0 0
    %479 = vmatpush1.bf16.msra.mxu0 %v461
    %480 = vmatprep.subr.bf16.mxu0 0
    %481 = vmatpush1.bf16.msra.mxu0 %v462
    %482 = vmatprep.subr.bf16.mxu0 0
    %483 = vmatpush1.bf16.msra.mxu0 %v463
    %484 = vmatprep.subr.bf16.mxu0 0
    %485 = vmatpush1.bf16.msra.mxu0 %v464
    %486 = vmatprep.subr.bf16.mxu0 0
    %487 = vmatpush1.bf16.msra.mxu0 %v465
    %488 = vmatprep.subr.bf16.mxu0 0
    %489 = vmatpush1.bf16.msra.mxu0 %v466
    %490 = vmatprep.subr.bf16.mxu0 0
    %491 = vmatpush1.bf16.msra.mxu0 %v467
    %492 = vmatprep.subr.bf16.mxu0 0
    %493 = vmatpush1.bf16.msra.mxu0 0
    %494 = vmatprep.subr.bf16.mxu0 0
    %495 = vmatpush1.bf16.msra.mxu0 0
    %496 = vmatprep.subr.bf16.mxu0 0
    %497 = vmatpush1.bf16.msra.mxu0 0
    %498 = vmatprep.subr.bf16.mxu0 0
    %499 = vmatpush1.bf16.msra.mxu0 0
    %500 = vmatprep.subr.bf16.mxu0 0
    %501 = vmatpush1.bf16.msra.mxu0 0
    %502 = vmatprep.subr.bf16.mxu0 0
    %503 = vmatpush1.bf16.msra.mxu0 0
    %504 = vmatprep.subr.bf16.mxu0 0
    %505 = vmatpush1.bf16.msra.mxu0 0
    %506 = vmatprep.subr.bf16.mxu0 0
    %507 = vmatpush1.bf16.msra.mxu0 0
    %508 = vmatprep.mubr.bf16.mxu0 0
    %509 = vmatmul.mubr.bf16.gmra.mrb[0].mxu0 %v404
    %v510 = vpop.f32.mrb[0].mxu0
    %v511 = vadd.f32 %v426, %v510
    %v512 = vpop.f32.mrb[0].mxu0
    %v513 = vpop.f32.mrb[0].mxu0
    %v514 = vpop.f32.mrb[0].mxu0
    %515 = vdwg.mxu0
    %v516 = vmax.f32 %v511, 0.0
    %v517 = vld [vmem:[%s9] sm:$0xf]
    %v518 = vpack.c.bf16 %v516, %v516
    %519 = vmatprep.subr.bf16.mxu0 0
    %520 = vmatpush1.bf16.xpose.msra.mxu0 %v518
    %521 = vmatprep.subr.bf16.mxu0 0
    %522 = vmatpush1.bf16.xpose.msra.mxu0 0
    %523 = vmatprep.subr.bf16.mxu0 0
    %524 = vmatpush1.bf16.xpose.msra.mxu0 0
    %525 = vmatprep.subr.bf16.mxu0 0
    %526 = vmatpush1.bf16.xpose.msra.mxu0 0
    %527 = vmatprep.subr.bf16.mxu0 0
    %528 = vmatpush1.bf16.xpose.msra.mxu0 0
    %529 = vmatprep.subr.bf16.mxu0 0
    %530 = vmatpush1.bf16.xpose.msra.mxu0 0
    %531 = vmatprep.subr.bf16.mxu0 0
    %532 = vmatpush1.bf16.xpose.msra.mxu0 0
    %533 = vmatprep.subr.bf16.mxu0 0
    %534 = vmatpush1.bf16.xpose.msra.mxu0 0
    %535 = vmatprep.subr.bf16.mxu0 0
    %536 = vmatpush1.bf16.xpose.msra.mxu0 0
    %537 = vmatprep.subr.bf16.mxu0 0
    %538 = vmatpush1.bf16.xpose.msra.mxu0 0
    %539 = vmatprep.subr.bf16.mxu0 0
    %540 = vmatpush1.bf16.xpose.msra.mxu0 0
    %541 = vmatprep.subr.bf16.mxu0 0
    %542 = vmatpush1.bf16.xpose.msra.mxu0 0
    %543 = vmatprep.subr.bf16.mxu0 0
    %544 = vmatpush1.bf16.xpose.msra.mxu0 0
    %545 = vmatprep.subr.bf16.mxu0 0
    %546 = vmatpush1.bf16.xpose.msra.mxu0 0
    %547 = vmatprep.subr.bf16.mxu0 0
    %548 = vmatpush1.bf16.xpose.msra.mxu0 0
    %549 = vmatprep.subr.bf16.mxu0 0
    %550 = vmatpush1.bf16.xpose.msra.mxu0 0
    %551 = vmatprep.mubr.bf16.mxu0 0
    %552 = vmatmul.mubr.bf16.gmra.mrb[0].mxu0 %v517
    %v553 = vpop.f32.mrb[0].mxu0
    %v554 = vadd.f32 0.0, %v553
    %v555 = vpop.f32.mrb[0].mxu0
    %v556 = vpop.f32.mrb[0].mxu0
    %v557 = vpop.f32.mrb[0].mxu0
    %558 = vdwg.mxu0
    %v559 = vld [vmem:[#allocation2] sm:$0x1]
    %561 = vset.pattern.permute.xlu0 0
    %562 = vperm.xlu0 %561, %v559
    %v563 = vpop.permute.xlu0 %562
    %v565 = vlaneseq
    %v566 = vshrl.u32 %v565, 7
    %v567 = vsub.s32 0, %v566
    %v568 = vrot.slane %v563, %v567
    %v569 = vadd.f32 %v554, %v568
    %vm570 = vcmask 57344
    %571 = vst.msk [vmem:[#allocation12] sm:$0x1] %vm570, %v569
    // Predicated region
    $region66: #{tpu_custom_call.1} parent=1 // pred_check
      _
    $region67: #{tpu_custom_call.1} parent=1 // pred_check_branch
      %573 = sbr.rel (0) target = $region69
    $region68: #{tpu_custom_call.1} parent=1 // pred_region
      %s575 = ssub.s32 16, 16
      %576 = vsyncadd [#allocation5], %s575
      %s578 = sshll.u32 [#allocation12], 4
      %s579 = int_to_ptr.vmem [resolvable:$true] %s578
      %581 = dma.vmem_to_hbm [thread:$0]  %s579, 16, %s11, [#allocation5]
    $region69: #{tpu_custom_call.1} parent=1 // pred_fallthru
      _
    // Predicated region
    $region70: #{tpu_custom_call.1} parent=1 // pred_check
      _
    $region71: #{tpu_custom_call.1} parent=1 // pred_check_branch
      %583 = sbr.rel (0) target = $region73
    $region72: #{tpu_custom_call.1} parent=1 // pred_region
      %584 = dma.done [#allocation5], 16
    $region73: #{tpu_custom_call.1} parent=1 // pred_fallthru
      _
    %585 = vsyncpa [#allocation4], 1
    %586 = vsyncpa [#allocation7], 1
    %587 = vsyncpa [#allocation10], 1
    %588 = vsyncpa [#allocation5], 1

// kernel: tpu_custom_call.1
$region0: #{tpu_custom_call.1}
  #allocation0 [shape = 'u32[]', space=smem, size = 0x4, offset = 0x4, fixed_abs, tag = 'smem constant byte address 0x4 - core index']
  #allocation1 [shape = 'u32[144,128]{1,0:T(1,128)}', space=vmem, size = 0x12000, scoped, tag = 'internal scratch']
  #allocation2 [shape = 'f32[1,1]{1,0:T(1,128)S(1)}', space=vmem, size = 0x200, scoped, tag = 'scoped memory for tpu_custom_call.1']
  %s0 = inlined_call_operand.hbm [shape: f32[8,32], index: 0, kind: input, shape index: {}]
  %s1 = inlined_call_operand.hbm [shape: bf16[32,128], index: 1, kind: input, shape index: {}]
  %s2 = inlined_call_operand.vmem [shape: f32[1,128], index: 2, kind: input, shape index: {}]
  %s3 = inlined_call_operand.hbm [shape: bf16[128,128], index: 3, kind: input, shape index: {}]
  %s4 = inlined_call_operand.vmem [shape: f32[1,128], index: 4, kind: input, shape index: {}]
  %s5 = inlined_call_operand.hbm [shape: bf16[128,128], index: 5, kind: input, shape index: {}]
  %s6 = inlined_call_operand.vmem [shape: f32[1,128], index: 6, kind: input, shape index: {}]
  %s7 = inlined_call_operand.hbm [shape: bf16[128,128], index: 7, kind: input, shape index: {}]
  %s8 = inlined_call_operand.vmem [shape: f32[1,128], index: 8, kind: input, shape index: {}]
  %s9 = inlined_call_operand.vmem [shape: bf16[8,128], index: 9, kind: input, shape index: {}]
  %s10 = inlined_call_operand.<no memory space> [shape: f32[1,1], index: 10, kind: input, shape index: {}]
  %s11 = inlined_call_operand.hbm [shape: f32[1,8], index: 11, kind: output, shape index: {}]
  %s12 = sld [smem:[#allocation0]]
  $region74: #{tpu_custom_call.1} parent=0
    _
  %s14 = ssub.s32 1, %s12
  %s15 = scalar_select 0, %s14, %s12
  %v16 = vstv %s10
  %17 = vst [vmem:[#allocation2] sm:$0x1] %v16
  $region1: #{tpu_custom_call.1} parent=0
    #allocation3 [shape = 'u8[4096]{0}', space=vmem, size = 0x1000, scoped, tag = 'input window, operand 0, single buffered']
    #allocation4 [shape = 's32[1]{0}', space=sflag, size = 0x4, scoped, tag = 'scoped memory for tpu_custom_call.1']
    #allocation5 [shape = 's32[1]{0}', space=sflag, size = 0x4, scoped, tag = 'scoped memory for tpu_custom_call.1']
    #allocation6 [shape = 'u8[8192]{0}', space=vmem, size = 0x2000, scoped, tag = 'input window, operand 1, single buffered']
    #allocation7 [shape = 's32[1]{0}', space=sflag, size = 0x4, scoped, tag = 'scoped memory for tpu_custom_call.1']
    #allocation8 [shape = 'u8[32768]{0}', space=vmem, size = 0x8000, scoped, tag = 'input window, operand 3, single buffered']
    #allocation9 [shape = 'u8[32768]{0}', space=vmem, size = 0x8000, scoped, tag = 'input window, operand 5, single buffered']
    #allocation10 [shape = 's32[1]{0}', space=sflag, size = 0x4, scoped, tag = 'scoped memory for tpu_custom_call.1']
    #allocation11 [shape = 'u8[32768]{0}', space=vmem, size = 0x8000, scoped, tag = 'input window, operand 7, single buffered']
    #allocation12 [shape = 'u8[512]{0}', space=vmem, size = 0x400, scoped, tag = 'output window, operand 0, single buffered']
    %18 = vsyncpa [#allocation4], 0
    %19 = vsyncpa [#allocation7], 0
    %20 = vsyncpa [#allocation10], 0
    %21 = vsyncpa [#allocation5], 0
    // Predicated region
    $region2: #{tpu_custom_call.1} parent=1 // pred_check
      _
    $region3: #{tpu_custom_call.1} parent=1 // pred_check_branch
      %23 = sbr.rel (0) target = $region5
    $region4: #{tpu_custom_call.1} parent=1 // pred_region
      %s25 = ssub.s32 128, 128
      %26 = vsyncadd [#allocation4], %s25
      %s28 = sshll.u32 [#allocation3], 4
      %s29 = int_to_ptr.vmem [resolvable:$true] %s28
      %31 = dma.hbm_to_vmem [thread:$0]  %s0, 128, %s29, [#allocation4]
    $region5: #{tpu_custom_call.1} parent=1 // pred_fallthru
      _
    // Predicated region
    $region6: #{tpu_custom_call.1} parent=1 // pred_check
      _
    $region7: #{tpu_custom_call.1} parent=1 // pred_check_branch
      %33 = sbr.rel (0) target = $region9
    $region8: #{tpu_custom_call.1} parent=1 // pred_region
      %s35 = ssub.s32 256, 256
      %36 = vsyncadd [#allocation7], %s35
      %s37 = sshll.u32 [#allocation6], 4
      %s38 = int_to_ptr.vmem [resolvable:$true] %s37
      %43 = dma.hbm_to_vmem [thread:$0]  %s1, 256, %s38, [#allocation7], 64, 64, 4
    $region9: #{tpu_custom_call.1} parent=1 // pred_fallthru
      _
    // Predicated region
    $region10: #{tpu_custom_call.1} parent=1 // pred_check
      _
    $region11: #{tpu_custom_call.1} parent=1 // pred_check_branch
      %45 = sbr.rel (0) target = $region13
    $region12: #{tpu_custom_call.1} parent=1 // pred_region
      _
    $region13: #{tpu_custom_call.1} parent=1 // pred_fallthru
      _
    // Predicated region
    $region14: #{tpu_custom_call.1} parent=1 // pred_check
      _
    $region15: #{tpu_custom_call.1} parent=1 // pred_check_branch
      %47 = sbr.rel (0) target = $region17
    $region16: #{tpu_custom_call.1} parent=1 // pred_region
      %s49 = ssub.s32 1024, 1024
      %50 = vsyncadd [#allocation7], %s49
      %s51 = sshll.u32 [#allocation8], 4
      %s52 = int_to_ptr.vmem [resolvable:$true] %s51
      %57 = dma.hbm_to_vmem [thread:$0]  %s3, 1024, %s52, [#allocation7], 64, 64, 4
    $region17: #{tpu_custom_call.1} parent=1 // pred_fallthru
      _
    // Predicated region
    $region18: #{tpu_custom_call.1} parent=1 // pred_check
      _
    $region19: #{tpu_custom_call.1} parent=1 // pred_check_branch
      %59 = sbr.rel (0) target = $region21
    $region20: #{tpu_custom_call.1} parent=1 // pred_region
      _
    $region21: #{tpu_custom_call.1} parent=1 // pred_fallthru
      _
    // Predicated region
    $region22: #{tpu_custom_call.1} parent=1 // pred_check
      _
    $region23: #{tpu_custom_call.1} parent=1 // pred_check_branch
      %61 = sbr.rel (0) target = $region25
    $region24: #{tpu_custom_call.1} parent=1 // pred_region
      %s63 = ssub.s32 1024, 1024
      %64 = vsyncadd [#allocation10], %s63
      %s65 = sshll.u32 [#allocation9], 4
      %s66 = int_to_ptr.vmem [resolvable:$true] %s65
      %71 = dma.hbm_to_vmem [thread:$0]  %s5, 1024, %s66, [#allocation10], 64, 64, 4
    $region25: #{tpu_custom_call.1} parent=1 // pred_fallthru
      _
    // Predicated region
    $region26: #{tpu_custom_call.1} parent=1 // pred_check
      _
    $region27: #{tpu_custom_call.1} parent=1 // pred_check_branch
      %73 = sbr.rel (0) target = $region29
    $region28: #{tpu_custom_call.1} parent=1 // pred_region
      _
    $region29: #{tpu_custom_call.1} parent=1 // pred_fallthru
      _
    // Predicated region
    $region30: #{tpu_custom_call.1} parent=1 // pred_check
      _
    $region31: #{tpu_custom_call.1} parent=1 // pred_check_branch
      %75 = sbr.rel (0) target = $region33
    $region32: #{tpu_custom_call.1} parent=1 // pred_region
      %s77 = ssub.s32 1024, 1024
      %78 = vsyncadd [#allocation10], %s77
      %s79 = sshll.u32 [#allocation11], 4
      %s80 = int_to_ptr.vmem [resolvable:$true] %s79
      %85 = dma.hbm_to_vmem [thread:$0]  %s7, 1024, %s80, [#allocation10], 64, 64, 4
    $region33: #{tpu_custom_call.1} parent=1 // pred_fallthru
      _
    // Predicated region
    $region34: #{tpu_custom_call.1} parent=1 // pred_check
      _
    $region35: #{tpu_custom_call.1} parent=1 // pred_check_branch
      %87 = sbr.rel (0) target = $region37
    $region36: #{tpu_custom_call.1} parent=1 // pred_region
      _
    $region37: #{tpu_custom_call.1} parent=1 // pred_fallthru
      _
    // Predicated region
    $region38: #{tpu_custom_call.1} parent=1 // pred_check
      _
    $region39: #{tpu_custom_call.1} parent=1 // pred_check_branch
      %89 = sbr.rel (0) target = $region41
    $region40: #{tpu_custom_call.1} parent=1 // pred_region
      _
    $region41: #{tpu_custom_call.1} parent=1 // pred_fallthru
      _
    // Predicated region
    $region42: #{tpu_custom_call.1} parent=1 // pred_check
      _
    $region43: #{tpu_custom_call.1} parent=1 // pred_check_branch
      %91 = sbr.rel (0) target = $region45
    $region44: #{tpu_custom_call.1} parent=1 // pred_region
      _
    $region45: #{tpu_custom_call.1} parent=1 // pred_fallthru
      _
    // Predicated region
    $region46: #{tpu_custom_call.1} parent=1 // pred_check
      _
    $region47: #{tpu_custom_call.1} parent=1 // pred_check_branch
      %93 = sbr.rel (0) target = $region49
    $region48: #{tpu_custom_call.1} parent=1 // pred_region
      %94 = dma.done [#allocation4], 128
    $region49: #{tpu_custom_call.1} parent=1 // pred_fallthru
      _
    // Predicated region
    $region50: #{tpu_custom_call.1} parent=1 // pred_check
      _
    $region51: #{tpu_custom_call.1} parent=1 // pred_check_branch
      %96 = sbr.rel (0) target = $region53
    $region52: #{tpu_custom_call.1} parent=1 // pred_region
      %97 = dma.done [#allocation7], 256
    $region53: #{tpu_custom_call.1} parent=1 // pred_fallthru
      _
    // Predicated region
    $region54: #{tpu_custom_call.1} parent=1 // pred_check
      _
    $region55: #{tpu_custom_call.1} parent=1 // pred_check_branch
      %99 = sbr.rel (0) target = $region57
    $region56: #{tpu_custom_call.1} parent=1 // pred_region
      %100 = dma.done [#allocation7], 1024
    $region57: #{tpu_custom_call.1} parent=1 // pred_fallthru
      _
    // Predicated region
    $region58: #{tpu_custom_call.1} parent=1 // pred_check
      _
    $region59: #{tpu_custom_call.1} parent=1 // pred_check_branch
      %102 = sbr.rel (0) target = $region61
    $region60: #{tpu_custom_call.1} parent=1 // pred_region
      %103 = dma.done [#allocation10], 1024
    $region61: #{tpu_custom_call.1} parent=1 // pred_fallthru
      _
    // Predicated region
    $region62: #{tpu_custom_call.1} parent=1 // pred_check
      _
    $region63: #{tpu_custom_call.1} parent=1 // pred_check_branch
      %105 = sbr.rel (0) target = $region65
    $region64: #{tpu_custom_call.1} parent=1 // pred_region
      %106 = dma.done [#allocation10], 1024
    $region65: #{tpu_custom_call.1} parent=1 // pred_fallthru
      _
    %v108 = vld [vmem:[#allocation3] sm:$0xff]
    %v109 = vpack.c.bf16 %v108, %v108
    %v110 = vld [vmem:[#allocation6] sm:$0xf]
    %v111 = vld [vmem:[#allocation6 + $0x4] sm:$0xf]
    %v112 = vld [vmem:[#allocation6 + $0x8] sm:$0xf]
    %v113 = vld [vmem:[#allocation6 + $0xc] sm:$0xf]
    %v114 = vld [vmem:[%s2] sm:$0x1]
    %v116 = vlaneseq
    %v117 = vshrl.u32 %v116, 7
    %v118 = vsub.s32 0, %v117
    %v119 = vrot.slane %v114, %v118
    %v125 = vunpack.c.l.b16 %v110
    %v126 = vunpack.c.l.b16 %v111
    %v127 = vunpack.c.l.b16 %v112
    %v128 = vunpack.c.l.b16 %v113
    %v129 = vpack.c.b16 %v126, %v125
    %v130 = vpack.c.b16 %v128, %v127
    %vm133 = vcmask 261120
    %v135 = vsel %vm133, %v109, 0
    %137 = vmatprep.subr.bf16.mxu0 0
    %138 = vmatpush1.bf16.msra.mxu0 %v129
    %139 = vmatprep.subr.bf16.mxu0 0
    %140 = vmatpush1.bf16.msra.mxu0 %v130
    %141 = vmatprep.subr.bf16.mxu0 0
    %142 = vmatpush1.bf16.msra.mxu0 0
    %143 = vmatprep.subr.bf16.mxu0 0
    %144 = vmatpush1.bf16.msra.mxu0 0
    %145 = vmatprep.subr.bf16.mxu0 0
    %146 = vmatpush1.bf16.msra.mxu0 0
    %147 = vmatprep.subr.bf16.mxu0 0
    %148 = vmatpush1.bf16.msra.mxu0 0
    %149 = vmatprep.subr.bf16.mxu0 0
    %150 = vmatpush1.bf16.msra.mxu0 0
    %151 = vmatprep.subr.bf16.mxu0 0
    %152 = vmatpush1.bf16.msra.mxu0 0
    %153 = vmatprep.subr.bf16.mxu0 0
    %154 = vmatpush1.bf16.msra.mxu0 0
    %155 = vmatprep.subr.bf16.mxu0 0
    %156 = vmatpush1.bf16.msra.mxu0 0
    %157 = vmatprep.subr.bf16.mxu0 0
    %158 = vmatpush1.bf16.msra.mxu0 0
    %159 = vmatprep.subr.bf16.mxu0 0
    %160 = vmatpush1.bf16.msra.mxu0 0
    %161 = vmatprep.subr.bf16.mxu0 0
    %162 = vmatpush1.bf16.msra.mxu0 0
    %163 = vmatprep.subr.bf16.mxu0 0
    %164 = vmatpush1.bf16.msra.mxu0 0
    %165 = vmatprep.subr.bf16.mxu0 0
    %166 = vmatpush1.bf16.msra.mxu0 0
    %167 = vmatprep.subr.bf16.mxu0 0
    %168 = vmatpush1.bf16.msra.mxu0 0
    %169 = vmatprep.mubr.bf16.mxu0 0
    %170 = vmatmul.mubr.bf16.gmra.mrb[0].mxu0 %v135
    %v171 = vpop.f32.mrb[0].mxu0
    %v172 = vadd.f32 %v119, %v171
    %v173 = vpop.f32.mrb[0].mxu0
    %v174 = vpop.f32.mrb[0].mxu0
    %v175 = vpop.f32.mrb[0].mxu0
    %176 = vdwg.mxu0
    %v177 = vmax.f32 %v172, 0.0
    %v178 = vpack.c.bf16 %v177, %v177
    %v179 = vld [vmem:[#allocation8] sm:$0xf]
    %v180 = vld [vmem:[#allocation8 + $0x4] sm:$0xf]
    %v181 = vld [vmem:[#allocation8 + $0x8] sm:$0xf]
    %v182 = vld [vmem:[#allocation8 + $0xc] sm:$0xf]
    %v183 = vld [vmem:[#allocation8 + $0x10] sm:$0xf]
    %v184 = vld [vmem:[#allocation8 + $0x14] sm:$0xf]
    %v185 = vld [vmem:[#allocation8 + $0x18] sm:$0xf]
    %v186 = vld [vmem:[#allocation8 + $0x1c] sm:$0xf]
    %v187 = vld [vmem:[#allocation8 + $0x20] sm:$0xf]
    %v188 = vld [vmem:[#allocation8 + $0x24] sm:$0xf]
    %v189 = vld [vmem:[#allocation8 + $0x28] sm:$0xf]
    %v190 = vld [vmem:[#allocation8 + $0x2c] sm:$0xf]
    %v191 = vld [vmem:[#allocation8 + $0x30] sm:$0xf]
    %v192 = vld [vmem:[#allocation8 + $0x34] sm:$0xf]
    %v193 = vld [vmem:[#allocation8 + $0x38] sm:$0xf]
    %v194 = vld [vmem:[#allocation8 + $0x3c] sm:$0xf]
    %v195 = vld [vmem:[%s4] sm:$0x1]
    %v197 = vlaneseq
    %v198 = vshrl.u32 %v197, 7
    %v199 = vsub.s32 0, %v198
    %v200 = vrot.slane %v195, %v199
    %v218 = vunpack.c.l.b16 %v179
    %v219 = vunpack.c.l.b16 %v180
    %v220 = vunpack.c.l.b16 %v181
    %v221 = vunpack.c.l.b16 %v182
    %v222 = vunpack.c.l.b16 %v183
    %v223 = vunpack.c.l.b16 %v184
    %v224 = vunpack.c.l.b16 %v185
    %v225 = vunpack.c.l.b16 %v186
    %v226 = vunpack.c.l.b16 %v187
    %v227 = vunpack.c.l.b16 %v188
    %v228 = vunpack.c.l.b16 %v189
    %v229 = vunpack.c.l.b16 %v190
    %v230 = vunpack.c.l.b16 %v191
    %v231 = vunpack.c.l.b16 %v192
    %v232 = vunpack.c.l.b16 %v193
    %v233 = vunpack.c.l.b16 %v194
    %v234 = vpack.c.b16 %v219, %v218
    %v235 = vpack.c.b16 %v221, %v220
    %v236 = vpack.c.b16 %v223, %v222
    %v237 = vpack.c.b16 %v225, %v224
    %v238 = vpack.c.b16 %v227, %v226
    %v239 = vpack.c.b16 %v229, %v228
    %v240 = vpack.c.b16 %v231, %v230
    %v241 = vpack.c.b16 %v233, %v232
    %250 = vmatprep.subr.bf16.mxu0 0
    %251 = vmatpush1.bf16.msra.mxu0 %v234
    %252 = vmatprep.subr.bf16.mxu0 0
    %253 = vmatpush1.bf16.msra.mxu0 %v235
    %254 = vmatprep.subr.bf16.mxu0 0
    %255 = vmatpush1.bf16.msra.mxu0 %v236
    %256 = vmatprep.subr.bf16.mxu0 0
    %257 = vmatpush1.bf16.msra.mxu0 %v237
    %258 = vmatprep.subr.bf16.mxu0 0
    %259 = vmatpush1.bf16.msra.mxu0 %v238
    %260 = vmatprep.subr.bf16.mxu0 0
    %261 = vmatpush1.bf16.msra.mxu0 %v239
    %262 = vmatprep.subr.bf16.mxu0 0
    %263 = vmatpush1.bf16.msra.mxu0 %v240
    %264 = vmatprep.subr.bf16.mxu0 0
    %265 = vmatpush1.bf16.msra.mxu0 %v241
    %266 = vmatprep.subr.bf16.mxu0 0
    %267 = vmatpush1.bf16.msra.mxu0 0
    %268 = vmatprep.subr.bf16.mxu0 0
    %269 = vmatpush1.bf16.msra.mxu0 0
    %270 = vmatprep.subr.bf16.mxu0 0
    %271 = vmatpush1.bf16.msra.mxu0 0
    %272 = vmatprep.subr.bf16.mxu0 0
    %273 = vmatpush1.bf16.msra.mxu0 0
    %274 = vmatprep.subr.bf16.mxu0 0
    %275 = vmatpush1.bf16.msra.mxu0 0
    %276 = vmatprep.subr.bf16.mxu0 0
    %277 = vmatpush1.bf16.msra.mxu0 0
    %278 = vmatprep.subr.bf16.mxu0 0
    %279 = vmatpush1.bf16.msra.mxu0 0
    %280 = vmatprep.subr.bf16.mxu0 0
    %281 = vmatpush1.bf16.msra.mxu0 0
    %282 = vmatprep.mubr.bf16.mxu0 0
    %283 = vmatmul.mubr.bf16.gmra.mrb[0].mxu0 %v178
    %v284 = vpop.f32.mrb[0].mxu0
    %v285 = vadd.f32 %v200, %v284
    %v286 = vpop.f32.mrb[0].mxu0
    %v287 = vpop.f32.mrb[0].mxu0
    %v288 = vpop.f32.mrb[0].mxu0
    %289 = vdwg.mxu0
    %v290 = vmax.f32 %v285, 0.0
    %v291 = vpack.c.bf16 %v290, %v290
    %v292 = vld [vmem:[#allocation9] sm:$0xf]
    %v293 = vld [vmem:[#allocation9 + $0x4] sm:$0xf]
    %v294 = vld [vmem:[#allocation9 + $0x8] sm:$0xf]
    %v295 = vld [vmem:[#allocation9 + $0xc] sm:$0xf]
    %v296 = vld [vmem:[#allocation9 + $0x10] sm:$0xf]
    %v297 = vld [vmem:[#allocation9 + $0x14] sm:$0xf]
    %v298 = vld [vmem:[#allocation9 + $0x18] sm:$0xf]
    %v299 = vld [vmem:[#allocation9 + $0x1c] sm:$0xf]
    %v300 = vld [vmem:[#allocation9 + $0x20] sm:$0xf]
    %v301 = vld [vmem:[#allocation9 + $0x24] sm:$0xf]
    %v302 = vld [vmem:[#allocation9 + $0x28] sm:$0xf]
    %v303 = vld [vmem:[#allocation9 + $0x2c] sm:$0xf]
    %v304 = vld [vmem:[#allocation9 + $0x30] sm:$0xf]
    %v305 = vld [vmem:[#allocation9 + $0x34] sm:$0xf]
    %v306 = vld [vmem:[#allocation9 + $0x38] sm:$0xf]
    %v307 = vld [vmem:[#allocation9 + $0x3c] sm:$0xf]
    %v308 = vld [vmem:[%s6] sm:$0x1]
    %v310 = vlaneseq
    %v311 = vshrl.u32 %v310, 7
    %v312 = vsub.s32 0, %v311
    %v313 = vrot.slane %v308, %v312
    %v331 = vunpack.c.l.b16 %v292
    %v332 = vunpack.c.l.b16 %v293
    %v333 = vunpack.c.l.b16 %v294
    %v334 = vunpack.c.l.b16 %v295
    %v335 = vunpack.c.l.b16 %v296
    %v336 = vunpack.c.l.b16 %v297
    %v337 = vunpack.c.l.b16 %v298
    %v338 = vunpack.c.l.b16 %v299
    %v339 = vunpack.c.l.b16 %v300
    %v340 = vunpack.c.l.b16 %v301
    %v341 = vunpack.c.l.b16 %v302
    %v342 = vunpack.c.l.b16 %v303
    %v343 = vunpack.c.l.b16 %v304
    %v344 = vunpack.c.l.b16 %v305
    %v345 = vunpack.c.l.b16 %v306
    %v346 = vunpack.c.l.b16 %v307
    %v347 = vpack.c.b16 %v332, %v331
    %v348 = vpack.c.b16 %v334, %v333
    %v349 = vpack.c.b16 %v336, %v335
    %v350 = vpack.c.b16 %v338, %v337
    %v351 = vpack.c.b16 %v340, %v339
    %v352 = vpack.c.b16 %v342, %v341
    %v353 = vpack.c.b16 %v344, %v343
    %v354 = vpack.c.b16 %v346, %v345
    %363 = vmatprep.subr.bf16.mxu0 0
    %364 = vmatpush1.bf16.msra.mxu0 %v347
    %365 = vmatprep.subr.bf16.mxu0 0
    %366 = vmatpush1.bf16.msra.mxu0 %v348
    %367 = vmatprep.subr.bf16.mxu0 0
    %368 = vmatpush1.bf16.msra.mxu0 %v349
    %369 = vmatprep.subr.bf16.mxu0 0
    %370 = vmatpush1.bf16.msra.mxu0 %v350
    %371 = vmatprep.subr.bf16.mxu0 0
    %372 = vmatpush1.bf16.msra.mxu0 %v351
    %373 = vmatprep.subr.bf16.mxu0 0
    %374 = vmatpush1.bf16.msra.mxu0 %v352
    %375 = vmatprep.subr.bf16.mxu0 0
    %376 = vmatpush1.bf16.msra.mxu0 %v353
    %377 = vmatprep.subr.bf16.mxu0 0
    %378 = vmatpush1.bf16.msra.mxu0 %v354
    %379 = vmatprep.subr.bf16.mxu0 0
    %380 = vmatpush1.bf16.msra.mxu0 0
    %381 = vmatprep.subr.bf16.mxu0 0
    %382 = vmatpush1.bf16.msra.mxu0 0
    %383 = vmatprep.subr.bf16.mxu0 0
    %384 = vmatpush1.bf16.msra.mxu0 0
    %385 = vmatprep.subr.bf16.mxu0 0
    %386 = vmatpush1.bf16.msra.mxu0 0
    %387 = vmatprep.subr.bf16.mxu0 0
    %388 = vmatpush1.bf16.msra.mxu0 0
    %389 = vmatprep.subr.bf16.mxu0 0
    %390 = vmatpush1.bf16.msra.mxu0 0
    %391 = vmatprep.subr.bf16.mxu0 0
    %392 = vmatpush1.bf16.msra.mxu0 0
    %393 = vmatprep.subr.bf16.mxu0 0
    %394 = vmatpush1.bf16.msra.mxu0 0
    %395 = vmatprep.mubr.bf16.mxu0 0
    %396 = vmatmul.mubr.bf16.gmra.mrb[0].mxu0 %v291
    %v397 = vpop.f32.mrb[0].mxu0
    %v398 = vadd.f32 %v313, %v397
    %v399 = vpop.f32.mrb[0].mxu0
    %v400 = vpop.f32.mrb[0].mxu0
    %v401 = vpop.f32.mrb[0].mxu0
    %402 = vdwg.mxu0
    %v403 = vmax.f32 %v398, 0.0
    %v404 = vpack.c.bf16 %v403, %v403
    %v405 = vld [vmem:[#allocation11] sm:$0xf]
    %v406 = vld [vmem:[#allocation11 + $0x4] sm:$0xf]
    %v407 = vld [vmem:[#allocation11 + $0x8] sm:$0xf]
    %v408 = vld [vmem:[#allocation11 + $0xc] sm:$0xf]
    %v409 = vld [vmem:[#allocation11 + $0x10] sm:$0xf]
    %v410 = vld [vmem:[#allocation11 + $0x14] sm:$0xf]
    %v411 = vld [vmem:[#allocation11 + $0x18] sm:$0xf]
    %v412 = vld [vmem:[#allocation11 + $0x1c] sm:$0xf]
    %v413 = vld [vmem:[#allocation11 + $0x20] sm:$0xf]
    %v414 = vld [vmem:[#allocation11 + $0x24] sm:$0xf]
    %v415 = vld [vmem:[#allocation11 + $0x28] sm:$0xf]
    %v416 = vld [vmem:[#allocation11 + $0x2c] sm:$0xf]
    %v417 = vld [vmem:[#allocation11 + $0x30] sm:$0xf]
    %v418 = vld [vmem:[#allocation11 + $0x34] sm:$0xf]
    %v419 = vld [vmem:[#allocation11 + $0x38] sm:$0xf]
    %v420 = vld [vmem:[#allocation11 + $0x3c] sm:$0xf]
    %v421 = vld [vmem:[%s8] sm:$0x1]
    %v423 = vlaneseq
    %v424 = vshrl.u32 %v423, 7
    %v425 = vsub.s32 0, %v424
    %v426 = vrot.slane %v421, %v425
    %v444 = vunpack.c.l.b16 %v405
    %v445 = vunpack.c.l.b16 %v406
    %v446 = vunpack.c.l.b16 %v407
    %v447 = vunpack.c.l.b16 %v408
    %v448 = vunpack.c.l.b16 %v409
    %v449 = vunpack.c.l.b16 %v410
    %v450 = vunpack.c.l.b16 %v411
    %v451 = vunpack.c.l.b16 %v412
    %v452 = vunpack.c.l.b16 %v413
    %v453 = vunpack.c.l.b16 %v414
    %v454 = vunpack.c.l.b16 %v415
    %v455 = vunpack.c.l.b16 %v416
    %v456 = vunpack.c.l.b16 %v417
    %v457 = vunpack.c.l.b16 %v418
    %v458 = vunpack.c.l.b16 %v419
    %v459 = vunpack.c.l.b16 %v420
    %v460 = vpack.c.b16 %v445, %v444
    %v461 = vpack.c.b16 %v447, %v446
    %v462 = vpack.c.b16 %v449, %v448
    %v463 = vpack.c.b16 %v451, %v450
    %v464 = vpack.c.b16 %v453, %v452
    %v465 = vpack.c.b16 %v455, %v454
    %v466 = vpack.c.b16 %v457, %v456
    %v467 = vpack.c.b16 %v459, %v458
    %476 = vmatprep.subr.bf16.mxu0 0
    %477 = vmatpush1.bf16.msra.mxu0 %v460
    %478 = vmatprep.subr.bf16.mxu0 0
    %479 = vmatpush1.bf16.msra.mxu0 %v461
    %480 = vmatprep.subr.bf16.mxu0 0
    %481 = vmatpush1.bf16.msra.mxu0 %v462
    %482 = vmatprep.subr.bf16.mxu0 0
    %483 = vmatpush1.bf16.msra.mxu0 %v463
    %484 = vmatprep.subr.bf16.mxu0 0
    %485 = vmatpush1.bf16.msra.mxu0 %v464
    %486 = vmatprep.subr.bf16.mxu0 0
    %487 = vmatpush1.bf16.msra.mxu0 %v465
    %488 = vmatprep.subr.bf16.mxu0 0
    %489 = vmatpush1.bf16.msra.mxu0 %v466
    %490 = vmatprep.subr.bf16.mxu0 0
    %491 = vmatpush1.bf16.msra.mxu0 %v467
    %492 = vmatprep.subr.bf16.mxu0 0
    %493 = vmatpush1.bf16.msra.mxu0 0
    %494 = vmatprep.subr.bf16.mxu0 0
    %495 = vmatpush1.bf16.msra.mxu0 0
    %496 = vmatprep.subr.bf16.mxu0 0
    %497 = vmatpush1.bf16.msra.mxu0 0
    %498 = vmatprep.subr.bf16.mxu0 0
    %499 = vmatpush1.bf16.msra.mxu0 0
    %500 = vmatprep.subr.bf16.mxu0 0
    %501 = vmatpush1.bf16.msra.mxu0 0
    %502 = vmatprep.subr.bf16.mxu0 0
    %503 = vmatpush1.bf16.msra.mxu0 0
    %504 = vmatprep.subr.bf16.mxu0 0
    %505 = vmatpush1.bf16.msra.mxu0 0
    %506 = vmatprep.subr.bf16.mxu0 0
    %507 = vmatpush1.bf16.msra.mxu0 0
    %508 = vmatprep.mubr.bf16.mxu0 0
    %509 = vmatmul.mubr.bf16.gmra.mrb[0].mxu0 %v404
    %v510 = vpop.f32.mrb[0].mxu0
    %v511 = vadd.f32 %v426, %v510
    %v512 = vpop.f32.mrb[0].mxu0
    %v513 = vpop.f32.mrb[0].mxu0
    %v514 = vpop.f32.mrb[0].mxu0
    %515 = vdwg.mxu0
    %v516 = vmax.f32 %v511, 0.0
    %v517 = vld [vmem:[%s9] sm:$0xf]
    %v518 = vpack.c.bf16 %v516, %v516
    %519 = vmatprep.subr.bf16.mxu0 0
    %520 = vmatpush1.bf16.xpose.msra.mxu0 %v518
    %521 = vmatprep.subr.bf16.mxu0 0
    %522 = vmatpush1.bf16.xpose.msra.mxu0 0
    %523 = vmatprep.subr.bf16.mxu0 0
    %524 = vmatpush1.bf16.xpose.msra.mxu0 0
    %525 = vmatprep.subr.bf16.mxu0 0
    %526 = vmatpush1.bf16.xpose.msra.mxu0 0
    %527 = vmatprep.subr.bf16.mxu0 0
    %528 = vmatpush1.bf16.xpose.msra.mxu0 0
    %529 = vmatprep.subr.bf16.mxu0 0
    %530 = vmatpush1.bf16.xpose.msra.mxu0 0
    %531 = vmatprep.subr.bf16.mxu0 0
    %532 = vmatpush1.bf16.xpose.msra.mxu0 0
    %533 = vmatprep.subr.bf16.mxu0 0
    %534 = vmatpush1.bf16.xpose.msra.mxu0 0
    %535 = vmatprep.subr.bf16.mxu0 0
    %536 = vmatpush1.bf16.xpose.msra.mxu0 0
    %537 = vmatprep.subr.bf16.mxu0 0
    %538 = vmatpush1.bf16.xpose.msra.mxu0 0
    %539 = vmatprep.subr.bf16.mxu0 0
    %540 = vmatpush1.bf16.xpose.msra.mxu0 0
    %541 = vmatprep.subr.bf16.mxu0 0
    %542 = vmatpush1.bf16.xpose.msra.mxu0 0
    %543 = vmatprep.subr.bf16.mxu0 0
    %544 = vmatpush1.bf16.xpose.msra.mxu0 0
    %545 = vmatprep.subr.bf16.mxu0 0
    %546 = vmatpush1.bf16.xpose.msra.mxu0 0
    %547 = vmatprep.subr.bf16.mxu0 0
    %548 = vmatpush1.bf16.xpose.msra.mxu0 0
    %549 = vmatprep.subr.bf16.mxu0 0
    %550 = vmatpush1.bf16.xpose.msra.mxu0 0
    %551 = vmatprep.mubr.bf16.mxu0 0
    %552 = vmatmul.mubr.bf16.gmra.mrb[0].mxu0 %v517
    %v553 = vpop.f32.mrb[0].mxu0
    %v554 = vadd.f32 0.0, %v553
    %v555 = vpop.f32.mrb[0].mxu0
    %v556 = vpop.f32.mrb[0].mxu0
    %v557 = vpop.f32.mrb[0].mxu0
    %558 = vdwg.mxu0
    %v559 = vld [vmem:[#allocation2] sm:$0x1]
    %561 = vset.pattern.permute.xlu0 0
    %562 = vperm.xlu0 %561, %v559
    %v563 = vpop.permute.xlu0 %562
    %v565 = vlaneseq
    %v566 = vshrl.u32 %v565, 7
    %v567 = vsub.s32 0, %v566
    %v568 = vrot.slane %v563, %v567
    %v569 = vadd.f32 %v554, %v568
    %vm570 = vcmask 57344
    %571 = vst.msk [vmem:[#allocation12] sm:$0x1] %vm570, %v569
    // Predicated region
    $region66: #{tpu_custom_call.1} parent=1 // pred_check
      _
    $region67: #{tpu_custom_call.1} parent=1 // pred_check_branch
      %573 = sbr.rel (0) target = $region69
    $region68: #{tpu_custom_call.1} parent=1 // pred_region
      %s575 = ssub.s32 16, 16
      %576 = vsyncadd [#allocation5], %s575
      %s578 = sshll.u32 [#allocation12], 4
      %s579 = int_to_ptr.vmem [resolvable:$true] %s578
      %581 = dma.vmem_to_hbm [thread:$0]  %s579, 16, %s11, [#allocation5]
    $region69: #{tpu_custom_call.1} parent=1 // pred_fallthru
      _
    // Predicated region
    $region70: #{tpu_custom_call.1} parent=1 // pred_check
      _
    $region71: #{tpu_custom_call.1} parent=1 // pred_check_branch
      %583 = sbr.rel (0) target = $region73
    $region72: #{tpu_custom_call.1} parent=1 // pred_region
      %584 = dma.done [#allocation5], 16
    $region73: #{tpu_custom_call.1} parent=1 // pred_fallthru
      _
    %585 = vsyncpa [#allocation4], 1
    %586 = vsyncpa [#allocation7], 1
    %587 = vsyncpa [#allocation10], 1
    %588 = vsyncpa [#allocation5], 1

</llo_original>
